<compile_context>
chip_gen: v6e
topology: v6e:2x2x1
jax: 0.10.0
libtpu: 0.0.40
codegen_flags: <defaults>
</compile_context>

<pallas_src>
import functools

import jax
import jax.numpy as jnp
from jax.experimental import pallas as pl
from jax.experimental.pallas import tpu as pltpu


def _rmsnorm_kernel(x_ref, w_ref, o_ref, *, eps: float, inv_dim: float,
                    chunk: int):
    # x_ref: (tm, D) row tile, w_ref: (1, D) weight, o_ref: (tm, D) output.
    # (1 + weight): one upcast + add per tile, reused by every chunk.
    scale = 1.0 + w_ref[...].astype(jnp.float32)            # (1, D)
    n_chunks = x_ref.shape[0] // chunk                       # static int

    def body(c, carry):
        r = pl.multiple_of(c * chunk, chunk)
        x = x_ref[pl.ds(r, chunk), :].astype(jnp.float32)    # (chunk, D) f32
        ssq = jnp.sum(x * x, axis=-1, keepdims=True)          # (chunk, 1)
        inv = jax.lax.rsqrt(ssq * inv_dim + eps)              # EUP rsqrt
        o_ref[pl.ds(r, chunk), :] = ((x * inv) * scale).astype(o_ref.dtype)
        return carry

    jax.lax.fori_loop(0, n_chunks, body, 0, unroll=True)


def _tpu_memory_profile():
    """(vmem_limit_bytes, tile_budget_bytes, min_grid_steps) for this chip."""
    vmem_cap = None
    try:
        vmem_cap = pltpu.get_tpu_info().vmem_capacity_bytes
    except Exception:
        vmem_cap = None
    if vmem_cap is not None and vmem_cap > (96 << 20):
        # v5e / v6e class: 128 MiB physical VMEM per TensorCore, 1 TC.
        return 96 << 20, 64 << 20, 4
    # v7x class (64 MiB per TC, 2 TCs) or unknown: stay conservative.
    return 48 << 20, 24 << 20, 8


def _pick_tiles(rows: int, dim: int, itemsize: int,
                tile_budget: int, min_steps: int) -> tuple[int, int]:
    """Choose (row_tile, chunk): large sublane-aligned tile + vreg-scale chunk."""
    # Sublane packing granule: 8 rows for 4-byte, 16 for 2-byte, 32 for 1-byte.
    packing = max(8, 32 // itemsize)

    # Per-row VMEM cost: double-buffered input + double-buffered output, plus a
    # small slack term (the f32 temporaries are now chunk-sized, not tile-sized).
    per_row_bytes = dim * (4 * itemsize + 4)
    row_tile = tile_budget // max(per_row_bytes, 1)
    row_tile = max(packing, min(1024, (row_tile // packing) * packing))

    # Keep >= min_steps grid steps when rows allow: DMA/compute overlap, and on
    # v7x enough steps per TensorCore after the megacore split.
    if rows >= min_steps * packing:
        cap = max(packing, (pl.cdiv(rows, min_steps) // packing) * packing)
        row_tile = min(row_tile, cap)

    # Compute sub-chunk: per-chunk f32 temp (chunk*dim*4 B) near vreg scale,
    # while keeping the unrolled trip count modest.
    chunk = max(packing, ((256 * 1024) // max(dim * 4, 1) // packing) * packing)
    chunk = min(chunk, row_tile)
    max_chunks = 16
    if row_tile // chunk > max_chunks:
        chunk = min(row_tile,
                    ((pl.cdiv(row_tile, max_chunks) + packing - 1)
                     // packing) * packing)
    # Make the tile an exact multiple of the chunk.
    row_tile = max(chunk, (row_tile // chunk) * chunk)
    return row_tile, chunk


def gemmoe_rms_norm(x: jax.Array, weight: jax.Array, eps: float = 1e-6,
                    *, row_tile: int | None = None) -> jax.Array:
    """RMSNorm over the last axis of x, matching GemmoeDynRMSNorm.forward."""
    orig_shape = x.shape
    dim = orig_shape[-1]
    assert weight.shape == (dim,)

    x2d = x.reshape(-1, dim)
    rows = x2d.shape[0]
    if rows == 0:
        return x  # degenerate edge case: nothing to normalize

    itemsize = jnp.dtype(x.dtype).itemsize
    vmem_limit, tile_budget, min_steps = _tpu_memory_profile()

    if row_tile is None:
        row_tile, chunk = _pick_tiles(rows, dim, itemsize, tile_budget,
                                      min_steps)
    else:
        # User-forced tile: process it as a single chunk (always divides).
        chunk = row_tile

    w2d = weight.reshape(1, dim)

    # Ragged last block is handled by Pallas: out-of-bounds writes are masked,
    # and garbage in padded rows cannot contaminate valid rows because the
    # reduction is strictly per-row. No jnp.pad / slicing needed.
    grid = (pl.cdiv(rows, row_tile),)

    cost = pl.CostEstimate(
        flops=6 * rows * dim,
        transcendentals=rows,
        bytes_accessed=2 * rows * dim * itemsize
        + dim * jnp.dtype(weight.dtype).itemsize,
    )

    out = pl.pallas_call(
        functools.partial(_rmsnorm_kernel, eps=eps, inv_dim=1.0 / dim,
                          chunk=chunk),
        out_shape=jax.ShapeDtypeStruct((rows, dim), x.dtype),
        grid_spec=pltpu.PrefetchScalarGridSpec(
            num_scalar_prefetch=0,
            grid=grid,
            in_specs=[
                pl.BlockSpec((row_tile, dim), lambda i: (i, 0)),
                pl.BlockSpec((1, dim), lambda i: (0, 0)),
            ],
            out_specs=pl.BlockSpec((row_tile, dim), lambda i: (i, 0)),
        ),
        compiler_params=pltpu.CompilerParams(
            dimension_semantics=("parallel",),
            vmem_limit_bytes=vmem_limit,
        ),
        cost_estimate=cost,
    )(x2d, w2d)

    return out.reshape(orig_shape)


def _reference(x, weight, eps=1e-6):
    xf = x.astype(jnp.float32)
    norm = xf * jax.lax.rsqrt(jnp.mean(xf * xf, axis=-1, keepdims=True) + eps)
    out = norm * (1.0 + weight.astype(jnp.float32))
    return out.astype(x.dtype)


if __name__ == "__main__":
    key = jax.random.PRNGKey(0)

    # --- Test 1: small shape matching the module's typical call, bf16 input ---
    batch, seq, hidden = 2, 8, 32
    kx, kw, kx2, kw2 = jax.random.split(key, 4)
    x = jax.random.normal(kx, (batch, seq, hidden), dtype=jnp.float32).astype(
        jnp.bfloat16)
    # Module init is zeros; add a small deterministic perturbation so the
    # (1 + weight) scaling path is actually exercised.
    weight = (jnp.zeros((hidden,), dtype=jnp.float32)
              + 0.01 * jax.random.normal(kw, (hidden,), dtype=jnp.float32))

    out = gemmoe_rms_norm(x, weight, eps=1e-6)
    out = jax.block_until_ready(out)

    ref = _reference(x, weight, eps=1e-6)
    assert out.shape == x.shape and out.dtype == x.dtype
    assert jnp.allclose(out.astype(jnp.float32), ref.astype(jnp.float32),
                        atol=1e-2, rtol=1e-2)

    # --- Test 2: ragged row count + 128-aligned dim, f32, forced small tile ---
    x2 = jax.random.normal(kx2, (3, 5, 256), dtype=jnp.float32)
    w2 = 0.05 * jax.random.normal(kw2, (256,), dtype=jnp.float32)
    out2 = gemmoe_rms_norm(x2, w2, eps=1e-6, row_tile=8)   # 15 rows -> ragged
    out2 = jax.block_until_ready(out2)
    ref2 = _reference(x2, w2, eps=1e-6)
    assert out2.shape == x2.shape and out2.dtype == x2.dtype
    assert jnp.allclose(out2, ref2, atol=1e-5, rtol=1e-5)

    # --- Test 3: auto tiling with multi-chunk inner loop (f32, 128-wide) ---
    x3 = jax.random.normal(kx, (64, 128), dtype=jnp.float32)
    w3 = 0.02 * jax.random.normal(kw, (128,), dtype=jnp.float32)
    out3 = jax.block_until_ready(gemmoe_rms_norm(x3, w3, eps=1e-6))
    ref3 = _reference(x3, w3, eps=1e-6)
    assert jnp.allclose(out3, ref3, atol=1e-5, rtol=1e-5)

    print("KERNEL_OK")
</pallas_src>

<mosaic_0001>
module attributes {stable_mosaic.version = 11 : i64} {
  func.func @_rmsnorm_kernel(%arg0: i32, %arg1: memref<1024x32xbf16, #tpu.memory_space<vmem>>, %arg2: memref<1x32xf32, #tpu.memory_space<vmem>>, %arg3: memref<1024x32xbf16, #tpu.memory_space<vmem>>) attributes {dimension_semantics = [#tpu.dimension_semantics<parallel>], iteration_bounds = array<i64: 1>, scalar_prefetch = 0 : i64, scratch_operands = 0 : i64, tpu.core_type = #tpu.core_type<tc>, window_params = [{transform_indices = @transform_0, window_bounds = array<i64: 1024, 32>}, {pipeline_mode = #tpu.pipeline_mode<synchronous>, transform_indices = @transform_1, window_bounds = array<i64: 1, 32>}, {transform_indices = @transform_2, window_bounds = array<i64: 1024, 32>}]} {
    %c0 = arith.constant 0 : index
    %c0_0 = arith.constant 0 : index
    %0 = vector.load %arg2[%c0, %c0_0] : memref<1x32xf32, #tpu.memory_space<vmem>>, vector<1x32xf32>
    %cst = arith.constant 1.000000e+00 : f32
    %1 = vector.broadcast %cst : f32 to vector<1x32xf32>
    %2 = arith.addf %1, %0 : vector<1x32xf32>
    %c0_i32 = arith.constant 0 : i32
    %c1024_i32 = arith.constant 1024 : i32
    %3 = arith.muli %c0_i32, %c1024_i32 : i32
    %4 = tpu.assume_multiple %3, 1024 : i32
    %5 = arith.index_cast %4 : i32 to index
    %c0_1 = arith.constant 0 : index
    %6 = vector.load %arg1[%5, %c0_1] : memref<1024x32xbf16, #tpu.memory_space<vmem>>, vector<1024x32xbf16>
    %7 = arith.extf %6 : vector<1024x32xbf16> to vector<1024x32xf32>
    %8 = arith.mulf %7, %7 : vector<1024x32xf32>
    %cst_2 = arith.constant dense<0.000000e+00> : vector<1024xf32>
    %9 = vector.multi_reduction <add>, %8, %cst_2 [1] : vector<1024x32xf32> to vector<1024xf32>
    %10 = vector.shape_cast %9 : vector<1024xf32> to vector<1024x1xf32>
    %cst_3 = arith.constant 3.125000e-02 : f32
    %11 = vector.broadcast %cst_3 : f32 to vector<1024x1xf32>
    %12 = arith.mulf %10, %11 : vector<1024x1xf32>
    %cst_4 = arith.constant 9.99999997E-7 : f32
    %13 = vector.broadcast %cst_4 : f32 to vector<1024x1xf32>
    %14 = arith.addf %12, %13 : vector<1024x1xf32>
    %15 = math.rsqrt %14 : vector<1024x1xf32>
    %16 = vector.broadcast %15 : vector<1024x1xf32> to vector<1024x32xf32>
    %17 = arith.mulf %7, %16 : vector<1024x32xf32>
    %18 = vector.broadcast %2 : vector<1x32xf32> to vector<1024x32xf32>
    %19 = arith.mulf %17, %18 : vector<1024x32xf32>
    %20 = arith.truncf %19 : vector<1024x32xf32> to vector<1024x32xbf16>
    %21 = arith.index_cast %4 : i32 to index
    %c0_5 = arith.constant 0 : index
    %22 = vector.load %arg3[%21, %c0_5] : memref<1024x32xbf16, #tpu.memory_space<vmem>>, vector<1024x32xbf16>
    tpu.vector_store %arg3[%21, %c0_5], %20 {strides = array<i32>} : memref<1024x32xbf16, #tpu.memory_space<vmem>>, vector<1024x32xbf16>,
    %c1_i32 = arith.constant 1 : i32
    return
  }
  func.func @transform_0(%arg0: i32) -> (i32, i32) {
    %c0_i32 = arith.constant 0 : i32
    %c0_i32_0 = arith.constant 0 : i32
    return %arg0, %c0_i32 : i32, i32
  }
  func.func @transform_1(%arg0: i32) -> (i32, i32) {
    %c0_i32 = arith.constant 0 : i32
    %c0_i32_0 = arith.constant 0 : i32
    %c0_i32_1 = arith.constant 0 : i32
    return %c0_i32, %c0_i32_0 : i32, i32
  }
  func.func @transform_2(%arg0: i32) -> (i32, i32) {
    %c0_i32 = arith.constant 0 : i32
    %c0_i32_0 = arith.constant 0 : i32
    return %arg0, %c0_i32 : i32, i32
  }
}

</mosaic_0001>

<llo_original>
// kernel: tpu_custom_call.1
$region0: #{tpu_custom_call.1}
  #allocation0 [shape = 'u32[]', space=smem, size = 0x4, offset = 0x4, fixed_abs, tag = 'smem constant byte address 0x4 - core index']
  #allocation1 [shape = 'u32[144,128]{1,0:T(1,128)}', space=vmem, size = 0x12000, scoped, tag = 'internal scratch']
  %s0 = inlined_call_operand.hbm [shape: bf16[16,32], index: 0, kind: input, shape index: {}]
  %s1 = inlined_call_operand.vmem [shape: f32[1,32], index: 1, kind: input, shape index: {}]
  %s2 = inlined_call_operand.hbm [shape: bf16[16,32], index: 2, kind: output, shape index: {}]
  %s3 = sld [smem:[#allocation0]]
  $region22: #{tpu_custom_call.1} parent=0
    _
  %s5 = ssub.s32 1, %s3
  %s6 = scalar_select 0, %s5, %s3
  $region1: #{tpu_custom_call.1} parent=0
    #allocation2 [shape = 'u8[262144]{0}', space=vmem, size = 0x40000, scoped, tag = 'input window, operand 0, single buffered']
    #allocation3 [shape = 's32[1]{0}', space=sflag, size = 0x4, scoped, tag = 'scoped memory for tpu_custom_call.1']
    #allocation4 [shape = 's32[1]{0}', space=sflag, size = 0x4, scoped, tag = 'scoped memory for tpu_custom_call.1']
    #allocation5 [shape = 'u8[262144]{0}', space=vmem, size = 0x40000, scoped, tag = 'output window, operand 0, single buffered']
    %7 = vsyncpa [#allocation3], 0
    %8 = vsyncpa [#allocation4], 0
    // Predicated region
    $region2: #{tpu_custom_call.1} parent=1 // pred_check
      _
    $region3: #{tpu_custom_call.1} parent=1 // pred_check_branch
      %10 = sbr.rel (0) target = $region5
    $region4: #{tpu_custom_call.1} parent=1 // pred_region
      %s12 = ssub.s32 8192, 128
      %13 = vsyncadd [#allocation3], %s12
      %s14 = sshll.u32 [#allocation2], 4
      %s15 = int_to_ptr.vmem [resolvable:$true] %s14
      %20 = dma.hbm_to_vmem [thread:$0]  %s0, 128, %s15, [#allocation3], 64, 64, 4
    $region5: #{tpu_custom_call.1} parent=1 // pred_fallthru
      _
    // Predicated region
    $region6: #{tpu_custom_call.1} parent=1 // pred_check
      _
    $region7: #{tpu_custom_call.1} parent=1 // pred_check_branch
      %22 = sbr.rel (0) target = $region9
    $region8: #{tpu_custom_call.1} parent=1 // pred_region
      _
    $region9: #{tpu_custom_call.1} parent=1 // pred_fallthru
      _
    // Predicated region
    $region10: #{tpu_custom_call.1} parent=1 // pred_check
      _
    $region11: #{tpu_custom_call.1} parent=1 // pred_check_branch
      %24 = sbr.rel (0) target = $region13
    $region12: #{tpu_custom_call.1} parent=1 // pred_region
      %25 = dma.done [#allocation3], 8192
    $region13: #{tpu_custom_call.1} parent=1 // pred_fallthru
      _
    %v26 = vld [vmem:[%s1] sm:$0x1]
    %v27 = vadd.f32 %v26, 1.0
    %v28 = vld [vmem:[#allocation2] sm:$0xf]
    %v29 = vld [vmem:[#allocation2 + $0x4] sm:$0xf]
    %v30 = vld [vmem:[#allocation2 + $0x8] sm:$0xf]
    %v31 = vld [vmem:[#allocation2 + $0xc] sm:$0xf]
    %v32 = vld [vmem:[#allocation2 + $0x10] sm:$0xf]
    %v33 = vld [vmem:[#allocation2 + $0x14] sm:$0xf]
    %v34 = vld [vmem:[#allocation2 + $0x18] sm:$0xf]
    %v35 = vld [vmem:[#allocation2 + $0x1c] sm:$0xf]
    %v36 = vld [vmem:[#allocation2 + $0x20] sm:$0xf]
    %v37 = vld [vmem:[#allocation2 + $0x24] sm:$0xf]
    %v38 = vld [vmem:[#allocation2 + $0x28] sm:$0xf]
    %v39 = vld [vmem:[#allocation2 + $0x2c] sm:$0xf]
    %v40 = vld [vmem:[#allocation2 + $0x30] sm:$0xf]
    %v41 = vld [vmem:[#allocation2 + $0x34] sm:$0xf]
    %v42 = vld [vmem:[#allocation2 + $0x38] sm:$0xf]
    %v43 = vld [vmem:[#allocation2 + $0x3c] sm:$0xf]
    %v44 = vld [vmem:[#allocation2 + $0x40] sm:$0xf]
    %v45 = vld [vmem:[#allocation2 + $0x44] sm:$0xf]
    %v46 = vld [vmem:[#allocation2 + $0x48] sm:$0xf]
    %v47 = vld [vmem:[#allocation2 + $0x4c] sm:$0xf]
    %v48 = vld [vmem:[#allocation2 + $0x50] sm:$0xf]
    %v49 = vld [vmem:[#allocation2 + $0x54] sm:$0xf]
    %v50 = vld [vmem:[#allocation2 + $0x58] sm:$0xf]
    %v51 = vld [vmem:[#allocation2 + $0x5c] sm:$0xf]
    %v52 = vld [vmem:[#allocation2 + $0x60] sm:$0xf]
    %v53 = vld [vmem:[#allocation2 + $0x64] sm:$0xf]
    %v54 = vld [vmem:[#allocation2 + $0x68] sm:$0xf]
    %v55 = vld [vmem:[#allocation2 + $0x6c] sm:$0xf]
    %v56 = vld [vmem:[#allocation2 + $0x70] sm:$0xf]
    %v57 = vld [vmem:[#allocation2 + $0x74] sm:$0xf]
    %v58 = vld [vmem:[#allocation2 + $0x78] sm:$0xf]
    %v59 = vld [vmem:[#allocation2 + $0x7c] sm:$0xf]
    %v60 = vld [vmem:[#allocation2 + $0x80] sm:$0xf]
    %v61 = vld [vmem:[#allocation2 + $0x84] sm:$0xf]
    %v62 = vld [vmem:[#allocation2 + $0x88] sm:$0xf]
    %v63 = vld [vmem:[#allocation2 + $0x8c] sm:$0xf]
    %v64 = vld [vmem:[#allocation2 + $0x90] sm:$0xf]
    %v65 = vld [vmem:[#allocation2 + $0x94] sm:$0xf]
    %v66 = vld [vmem:[#allocation2 + $0x98] sm:$0xf]
    %v67 = vld [vmem:[#allocation2 + $0x9c] sm:$0xf]
    %v68 = vld [vmem:[#allocation2 + $0xa0] sm:$0xf]
    %v69 = vld [vmem:[#allocation2 + $0xa4] sm:$0xf]
    %v70 = vld [vmem:[#allocation2 + $0xa8] sm:$0xf]
    %v71 = vld [vmem:[#allocation2 + $0xac] sm:$0xf]
    %v72 = vld [vmem:[#allocation2 + $0xb0] sm:$0xf]
    %v73 = vld [vmem:[#allocation2 + $0xb4] sm:$0xf]
    %v74 = vld [vmem:[#allocation2 + $0xb8] sm:$0xf]
    %v75 = vld [vmem:[#allocation2 + $0xbc] sm:$0xf]
    %v76 = vld [vmem:[#allocation2 + $0xc0] sm:$0xf]
    %v77 = vld [vmem:[#allocation2 + $0xc4] sm:$0xf]
    %v78 = vld [vmem:[#allocation2 + $0xc8] sm:$0xf]
    %v79 = vld [vmem:[#allocation2 + $0xcc] sm:$0xf]
    %v80 = vld [vmem:[#allocation2 + $0xd0] sm:$0xf]
    %v81 = vld [vmem:[#allocation2 + $0xd4] sm:$0xf]
    %v82 = vld [vmem:[#allocation2 + $0xd8] sm:$0xf]
    %v83 = vld [vmem:[#allocation2 + $0xdc] sm:$0xf]
    %v84 = vld [vmem:[#allocation2 + $0xe0] sm:$0xf]
    %v85 = vld [vmem:[#allocation2 + $0xe4] sm:$0xf]
    %v86 = vld [vmem:[#allocation2 + $0xe8] sm:$0xf]
    %v87 = vld [vmem:[#allocation2 + $0xec] sm:$0xf]
    %v88 = vld [vmem:[#allocation2 + $0xf0] sm:$0xf]
    %v89 = vld [vmem:[#allocation2 + $0xf4] sm:$0xf]
    %v90 = vld [vmem:[#allocation2 + $0xf8] sm:$0xf]
    %v91 = vld [vmem:[#allocation2 + $0xfc] sm:$0xf]
    %v92 = vld [vmem:[#allocation2 + $0x100] sm:$0xf]
    %v93 = vld [vmem:[#allocation2 + $0x104] sm:$0xf]
    %v94 = vld [vmem:[#allocation2 + $0x108] sm:$0xf]
    %v95 = vld [vmem:[#allocation2 + $0x10c] sm:$0xf]
    %v96 = vld [vmem:[#allocation2 + $0x110] sm:$0xf]
    %v97 = vld [vmem:[#allocation2 + $0x114] sm:$0xf]
    %v98 = vld [vmem:[#allocation2 + $0x118] sm:$0xf]
    %v99 = vld [vmem:[#allocation2 + $0x11c] sm:$0xf]
    %v100 = vld [vmem:[#allocation2 + $0x120] sm:$0xf]
    %v101 = vld [vmem:[#allocation2 + $0x124] sm:$0xf]
    %v102 = vld [vmem:[#allocation2 + $0x128] sm:$0xf]
    %v103 = vld [vmem:[#allocation2 + $0x12c] sm:$0xf]
    %v104 = vld [vmem:[#allocation2 + $0x130] sm:$0xf]
    %v105 = vld [vmem:[#allocation2 + $0x134] sm:$0xf]
    %v106 = vld [vmem:[#allocation2 + $0x138] sm:$0xf]
    %v107 = vld [vmem:[#allocation2 + $0x13c] sm:$0xf]
    %v108 = vld [vmem:[#allocation2 + $0x140] sm:$0xf]
    %v109 = vld [vmem:[#allocation2 + $0x144] sm:$0xf]
    %v110 = vld [vmem:[#allocation2 + $0x148] sm:$0xf]
    %v111 = vld [vmem:[#allocation2 + $0x14c] sm:$0xf]
    %v112 = vld [vmem:[#allocation2 + $0x150] sm:$0xf]
    %v113 = vld [vmem:[#allocation2 + $0x154] sm:$0xf]
    %v114 = vld [vmem:[#allocation2 + $0x158] sm:$0xf]
    %v115 = vld [vmem:[#allocation2 + $0x15c] sm:$0xf]
    %v116 = vld [vmem:[#allocation2 + $0x160] sm:$0xf]
    %v117 = vld [vmem:[#allocation2 + $0x164] sm:$0xf]
    %v118 = vld [vmem:[#allocation2 + $0x168] sm:$0xf]
    %v119 = vld [vmem:[#allocation2 + $0x16c] sm:$0xf]
    %v120 = vld [vmem:[#allocation2 + $0x170] sm:$0xf]
    %v121 = vld [vmem:[#allocation2 + $0x174] sm:$0xf]
    %v122 = vld [vmem:[#allocation2 + $0x178] sm:$0xf]
    %v123 = vld [vmem:[#allocation2 + $0x17c] sm:$0xf]
    %v124 = vld [vmem:[#allocation2 + $0x180] sm:$0xf]
    %v125 = vld [vmem:[#allocation2 + $0x184] sm:$0xf]
    %v126 = vld [vmem:[#allocation2 + $0x188] sm:$0xf]
    %v127 = vld [vmem:[#allocation2 + $0x18c] sm:$0xf]
    %v128 = vld [vmem:[#allocation2 + $0x190] sm:$0xf]
    %v129 = vld [vmem:[#allocation2 + $0x194] sm:$0xf]
    %v130 = vld [vmem:[#allocation2 + $0x198] sm:$0xf]
    %v131 = vld [vmem:[#allocation2 + $0x19c] sm:$0xf]
    %v132 = vld [vmem:[#allocation2 + $0x1a0] sm:$0xf]
    %v133 = vld [vmem:[#allocation2 + $0x1a4] sm:$0xf]
    %v134 = vld [vmem:[#allocation2 + $0x1a8] sm:$0xf]
    %v135 = vld [vmem:[#allocation2 + $0x1ac] sm:$0xf]
    %v136 = vld [vmem:[#allocation2 + $0x1b0] sm:$0xf]
    %v137 = vld [vmem:[#allocation2 + $0x1b4] sm:$0xf]
    %v138 = vld [vmem:[#allocation2 + $0x1b8] sm:$0xf]
    %v139 = vld [vmem:[#allocation2 + $0x1bc] sm:$0xf]
    %v140 = vld [vmem:[#allocation2 + $0x1c0] sm:$0xf]
    %v141 = vld [vmem:[#allocation2 + $0x1c4] sm:$0xf]
    %v142 = vld [vmem:[#allocation2 + $0x1c8] sm:$0xf]
    %v143 = vld [vmem:[#allocation2 + $0x1cc] sm:$0xf]
    %v144 = vld [vmem:[#allocation2 + $0x1d0] sm:$0xf]
    %v145 = vld [vmem:[#allocation2 + $0x1d4] sm:$0xf]
    %v146 = vld [vmem:[#allocation2 + $0x1d8] sm:$0xf]
    %v147 = vld [vmem:[#allocation2 + $0x1dc] sm:$0xf]
    %v148 = vld [vmem:[#allocation2 + $0x1e0] sm:$0xf]
    %v149 = vld [vmem:[#allocation2 + $0x1e4] sm:$0xf]
    %v150 = vld [vmem:[#allocation2 + $0x1e8] sm:$0xf]
    %v151 = vld [vmem:[#allocation2 + $0x1ec] sm:$0xf]
    %v152 = vld [vmem:[#allocation2 + $0x1f0] sm:$0xf]
    %v153 = vld [vmem:[#allocation2 + $0x1f4] sm:$0xf]
    %v154 = vld [vmem:[#allocation2 + $0x1f8] sm:$0xf]
    %v155 = vld [vmem:[#allocation2 + $0x1fc] sm:$0xf]
    %v156 = vunpack.c.l.bf16 %v28
    %v157 = vunpack.c.l.bf16 %v29
    %v158 = vunpack.c.l.bf16 %v30
    %v159 = vunpack.c.l.bf16 %v31
    %v160 = vunpack.c.l.bf16 %v32
    %v161 = vunpack.c.l.bf16 %v33
    %v162 = vunpack.c.l.bf16 %v34
    %v163 = vunpack.c.l.bf16 %v35
    %v164 = vunpack.c.l.bf16 %v36
    %v165 = vunpack.c.l.bf16 %v37
    %v166 = vunpack.c.l.bf16 %v38
    %v167 = vunpack.c.l.bf16 %v39
    %v168 = vunpack.c.l.bf16 %v40
    %v169 = vunpack.c.l.bf16 %v41
    %v170 = vunpack.c.l.bf16 %v42
    %v171 = vunpack.c.l.bf16 %v43
    %v172 = vunpack.c.l.bf16 %v44
    %v173 = vunpack.c.l.bf16 %v45
    %v174 = vunpack.c.l.bf16 %v46
    %v175 = vunpack.c.l.bf16 %v47
    %v176 = vunpack.c.l.bf16 %v48
    %v177 = vunpack.c.l.bf16 %v49
    %v178 = vunpack.c.l.bf16 %v50
    %v179 = vunpack.c.l.bf16 %v51
    %v180 = vunpack.c.l.bf16 %v52
    %v181 = vunpack.c.l.bf16 %v53
    %v182 = vunpack.c.l.bf16 %v54
    %v183 = vunpack.c.l.bf16 %v55
    %v184 = vunpack.c.l.bf16 %v56
    %v185 = vunpack.c.l.bf16 %v57
    %v186 = vunpack.c.l.bf16 %v58
    %v187 = vunpack.c.l.bf16 %v59
    %v188 = vunpack.c.l.bf16 %v60
    %v189 = vunpack.c.l.bf16 %v61
    %v190 = vunpack.c.l.bf16 %v62
    %v191 = vunpack.c.l.bf16 %v63
    %v192 = vunpack.c.l.bf16 %v64
    %v193 = vunpack.c.l.bf16 %v65
    %v194 = vunpack.c.l.bf16 %v66
    %v195 = vunpack.c.l.bf16 %v67
    %v196 = vunpack.c.l.bf16 %v68
    %v197 = vunpack.c.l.bf16 %v69
    %v198 = vunpack.c.l.bf16 %v70
    %v199 = vunpack.c.l.bf16 %v71
    %v200 = vunpack.c.l.bf16 %v72
    %v201 = vunpack.c.l.bf16 %v73
    %v202 = vunpack.c.l.bf16 %v74
    %v203 = vunpack.c.l.bf16 %v75
    %v204 = vunpack.c.l.bf16 %v76
    %v205 = vunpack.c.l.bf16 %v77
    %v206 = vunpack.c.l.bf16 %v78
    %v207 = vunpack.c.l.bf16 %v79
    %v208 = vunpack.c.l.bf16 %v80
    %v209 = vunpack.c.l.bf16 %v81
    %v210 = vunpack.c.l.bf16 %v82
    %v211 = vunpack.c.l.bf16 %v83
    %v212 = vunpack.c.l.bf16 %v84
    %v213 = vunpack.c.l.bf16 %v85
    %v214 = vunpack.c.l.bf16 %v86
    %v215 = vunpack.c.l.bf16 %v87
    %v216 = vunpack.c.l.bf16 %v88
    %v217 = vunpack.c.l.bf16 %v89
    %v218 = vunpack.c.l.bf16 %v90
    %v219 = vunpack.c.l.bf16 %v91
    %v220 = vunpack.c.l.bf16 %v92
    %v221 = vunpack.c.l.bf16 %v93
    %v222 = vunpack.c.l.bf16 %v94
    %v223 = vunpack.c.l.bf16 %v95
    %v224 = vunpack.c.l.bf16 %v96
    %v225 = vunpack.c.l.bf16 %v97
    %v226 = vunpack.c.l.bf16 %v98
    %v227 = vunpack.c.l.bf16 %v99
    %v228 = vunpack.c.l.bf16 %v100
    %v229 = vunpack.c.l.bf16 %v101
    %v230 = vunpack.c.l.bf16 %v102
    %v231 = vunpack.c.l.bf16 %v103
    %v232 = vunpack.c.l.bf16 %v104
    %v233 = vunpack.c.l.bf16 %v105
    %v234 = vunpack.c.l.bf16 %v106
    %v235 = vunpack.c.l.bf16 %v107
    %v236 = vunpack.c.l.bf16 %v108
    %v237 = vunpack.c.l.bf16 %v109
    %v238 = vunpack.c.l.bf16 %v110
    %v239 = vunpack.c.l.bf16 %v111
    %v240 = vunpack.c.l.bf16 %v112
    %v241 = vunpack.c.l.bf16 %v113
    %v242 = vunpack.c.l.bf16 %v114
    %v243 = vunpack.c.l.bf16 %v115
    %v244 = vunpack.c.l.bf16 %v116
    %v245 = vunpack.c.l.bf16 %v117
    %v246 = vunpack.c.l.bf16 %v118
    %v247 = vunpack.c.l.bf16 %v119
    %v248 = vunpack.c.l.bf16 %v120
    %v249 = vunpack.c.l.bf16 %v121
    %v250 = vunpack.c.l.bf16 %v122
    %v251 = vunpack.c.l.bf16 %v123
    %v252 = vunpack.c.l.bf16 %v124
    %v253 = vunpack.c.l.bf16 %v125
    %v254 = vunpack.c.l.bf16 %v126
    %v255 = vunpack.c.l.bf16 %v127
    %v256 = vunpack.c.l.bf16 %v128
    %v257 = vunpack.c.l.bf16 %v129
    %v258 = vunpack.c.l.bf16 %v130
    %v259 = vunpack.c.l.bf16 %v131
    %v260 = vunpack.c.l.bf16 %v132
    %v261 = vunpack.c.l.bf16 %v133
    %v262 = vunpack.c.l.bf16 %v134
    %v263 = vunpack.c.l.bf16 %v135
    %v264 = vunpack.c.l.bf16 %v136
    %v265 = vunpack.c.l.bf16 %v137
    %v266 = vunpack.c.l.bf16 %v138
    %v267 = vunpack.c.l.bf16 %v139
    %v268 = vunpack.c.l.bf16 %v140
    %v269 = vunpack.c.l.bf16 %v141
    %v270 = vunpack.c.l.bf16 %v142
    %v271 = vunpack.c.l.bf16 %v143
    %v272 = vunpack.c.l.bf16 %v144
    %v273 = vunpack.c.l.bf16 %v145
    %v274 = vunpack.c.l.bf16 %v146
    %v275 = vunpack.c.l.bf16 %v147
    %v276 = vunpack.c.l.bf16 %v148
    %v277 = vunpack.c.l.bf16 %v149
    %v278 = vunpack.c.l.bf16 %v150
    %v279 = vunpack.c.l.bf16 %v151
    %v280 = vunpack.c.l.bf16 %v152
    %v281 = vunpack.c.l.bf16 %v153
    %v282 = vunpack.c.l.bf16 %v154
    %v283 = vunpack.c.l.bf16 %v155
    %v284 = vmul.f32 %v156, %v156
    %v285 = vmul.f32 %v157, %v157
    %v286 = vmul.f32 %v158, %v158
    %v287 = vmul.f32 %v159, %v159
    %v288 = vmul.f32 %v160, %v160
    %v289 = vmul.f32 %v161, %v161
    %v290 = vmul.f32 %v162, %v162
    %v291 = vmul.f32 %v163, %v163
    %v292 = vmul.f32 %v164, %v164
    %v293 = vmul.f32 %v165, %v165
    %v294 = vmul.f32 %v166, %v166
    %v295 = vmul.f32 %v167, %v167
    %v296 = vmul.f32 %v168, %v168
    %v297 = vmul.f32 %v169, %v169
    %v298 = vmul.f32 %v170, %v170
    %v299 = vmul.f32 %v171, %v171
    %v300 = vmul.f32 %v172, %v172
    %v301 = vmul.f32 %v173, %v173
    %v302 = vmul.f32 %v174, %v174
    %v303 = vmul.f32 %v175, %v175
    %v304 = vmul.f32 %v176, %v176
    %v305 = vmul.f32 %v177, %v177
    %v306 = vmul.f32 %v178, %v178
    %v307 = vmul.f32 %v179, %v179
    %v308 = vmul.f32 %v180, %v180
    %v309 = vmul.f32 %v181, %v181
    %v310 = vmul.f32 %v182, %v182
    %v311 = vmul.f32 %v183, %v183
    %v312 = vmul.f32 %v184, %v184
    %v313 = vmul.f32 %v185, %v185
    %v314 = vmul.f32 %v186, %v186
    %v315 = vmul.f32 %v187, %v187
    %v316 = vmul.f32 %v188, %v188
    %v317 = vmul.f32 %v189, %v189
    %v318 = vmul.f32 %v190, %v190
    %v319 = vmul.f32 %v191, %v191
    %v320 = vmul.f32 %v192, %v192
    %v321 = vmul.f32 %v193, %v193
    %v322 = vmul.f32 %v194, %v194
    %v323 = vmul.f32 %v195, %v195
    %v324 = vmul.f32 %v196, %v196
    %v325 = vmul.f32 %v197, %v197
    %v326 = vmul.f32 %v198, %v198
    %v327 = vmul.f32 %v199, %v199
    %v328 = vmul.f32 %v200, %v200
    %v329 = vmul.f32 %v201, %v201
    %v330 = vmul.f32 %v202, %v202
    %v331 = vmul.f32 %v203, %v203
    %v332 = vmul.f32 %v204, %v204
    %v333 = vmul.f32 %v205, %v205
    %v334 = vmul.f32 %v206, %v206
    %v335 = vmul.f32 %v207, %v207
    %v336 = vmul.f32 %v208, %v208
    %v337 = vmul.f32 %v209, %v209
    %v338 = vmul.f32 %v210, %v210
    %v339 = vmul.f32 %v211, %v211
    %v340 = vmul.f32 %v212, %v212
    %v341 = vmul.f32 %v213, %v213
    %v342 = vmul.f32 %v214, %v214
    %v343 = vmul.f32 %v215, %v215
    %v344 = vmul.f32 %v216, %v216
    %v345 = vmul.f32 %v217, %v217
    %v346 = vmul.f32 %v218, %v218
    %v347 = vmul.f32 %v219, %v219
    %v348 = vmul.f32 %v220, %v220
    %v349 = vmul.f32 %v221, %v221
    %v350 = vmul.f32 %v222, %v222
    %v351 = vmul.f32 %v223, %v223
    %v352 = vmul.f32 %v224, %v224
    %v353 = vmul.f32 %v225, %v225
    %v354 = vmul.f32 %v226, %v226
    %v355 = vmul.f32 %v227, %v227
    %v356 = vmul.f32 %v228, %v228
    %v357 = vmul.f32 %v229, %v229
    %v358 = vmul.f32 %v230, %v230
    %v359 = vmul.f32 %v231, %v231
    %v360 = vmul.f32 %v232, %v232
    %v361 = vmul.f32 %v233, %v233
    %v362 = vmul.f32 %v234, %v234
    %v363 = vmul.f32 %v235, %v235
    %v364 = vmul.f32 %v236, %v236
    %v365 = vmul.f32 %v237, %v237
    %v366 = vmul.f32 %v238, %v238
    %v367 = vmul.f32 %v239, %v239
    %v368 = vmul.f32 %v240, %v240
    %v369 = vmul.f32 %v241, %v241
    %v370 = vmul.f32 %v242, %v242
    %v371 = vmul.f32 %v243, %v243
    %v372 = vmul.f32 %v244, %v244
    %v373 = vmul.f32 %v245, %v245
    %v374 = vmul.f32 %v246, %v246
    %v375 = vmul.f32 %v247, %v247
    %v376 = vmul.f32 %v248, %v248
    %v377 = vmul.f32 %v249, %v249
    %v378 = vmul.f32 %v250, %v250
    %v379 = vmul.f32 %v251, %v251
    %v380 = vmul.f32 %v252, %v252
    %v381 = vmul.f32 %v253, %v253
    %v382 = vmul.f32 %v254, %v254
    %v383 = vmul.f32 %v255, %v255
    %v384 = vmul.f32 %v256, %v256
    %v385 = vmul.f32 %v257, %v257
    %v386 = vmul.f32 %v258, %v258
    %v387 = vmul.f32 %v259, %v259
    %v388 = vmul.f32 %v260, %v260
    %v389 = vmul.f32 %v261, %v261
    %v390 = vmul.f32 %v262, %v262
    %v391 = vmul.f32 %v263, %v263
    %v392 = vmul.f32 %v264, %v264
    %v393 = vmul.f32 %v265, %v265
    %v394 = vmul.f32 %v266, %v266
    %v395 = vmul.f32 %v267, %v267
    %v396 = vmul.f32 %v268, %v268
    %v397 = vmul.f32 %v269, %v269
    %v398 = vmul.f32 %v270, %v270
    %v399 = vmul.f32 %v271, %v271
    %v400 = vmul.f32 %v272, %v272
    %v401 = vmul.f32 %v273, %v273
    %v402 = vmul.f32 %v274, %v274
    %v403 = vmul.f32 %v275, %v275
    %v404 = vmul.f32 %v276, %v276
    %v405 = vmul.f32 %v277, %v277
    %v406 = vmul.f32 %v278, %v278
    %v407 = vmul.f32 %v279, %v279
    %v408 = vmul.f32 %v280, %v280
    %v409 = vmul.f32 %v281, %v281
    %v410 = vmul.f32 %v282, %v282
    %v411 = vmul.f32 %v283, %v283
    %vm412 = vcmask 261120
    %v413 = vsel %vm412, %v284, 0.0
    %414 = vadd.xlane.f32.xlu0 %v413
    %v415 = vpop.xlane.xlu0 %414
    %v416 = vsel %vm412, %v285, 0.0
    %417 = vadd.xlane.f32.xlu0 %v416
    %v418 = vpop.xlane.xlu0 %417
    %v419 = vsel %vm412, %v286, 0.0
    %420 = vadd.xlane.f32.xlu0 %v419
    %v421 = vpop.xlane.xlu0 %420
    %v422 = vsel %vm412, %v287, 0.0
    %423 = vadd.xlane.f32.xlu0 %v422
    %v424 = vpop.xlane.xlu0 %423
    %v425 = vsel %vm412, %v288, 0.0
    %426 = vadd.xlane.f32.xlu0 %v425
    %v427 = vpop.xlane.xlu0 %426
    %v428 = vsel %vm412, %v289, 0.0
    %429 = vadd.xlane.f32.xlu0 %v428
    %v430 = vpop.xlane.xlu0 %429
    %v431 = vsel %vm412, %v290, 0.0
    %432 = vadd.xlane.f32.xlu0 %v431
    %v433 = vpop.xlane.xlu0 %432
    %v434 = vsel %vm412, %v291, 0.0
    %435 = vadd.xlane.f32.xlu0 %v434
    %v436 = vpop.xlane.xlu0 %435
    %v437 = vsel %vm412, %v292, 0.0
    %438 = vadd.xlane.f32.xlu0 %v437
    %v439 = vpop.xlane.xlu0 %438
    %v440 = vsel %vm412, %v293, 0.0
    %441 = vadd.xlane.f32.xlu0 %v440
    %v442 = vpop.xlane.xlu0 %441
    %v443 = vsel %vm412, %v294, 0.0
    %444 = vadd.xlane.f32.xlu0 %v443
    %v445 = vpop.xlane.xlu0 %444
    %v446 = vsel %vm412, %v295, 0.0
    %447 = vadd.xlane.f32.xlu0 %v446
    %v448 = vpop.xlane.xlu0 %447
    %v449 = vsel %vm412, %v296, 0.0
    %450 = vadd.xlane.f32.xlu0 %v449
    %v451 = vpop.xlane.xlu0 %450
    %v452 = vsel %vm412, %v297, 0.0
    %453 = vadd.xlane.f32.xlu0 %v452
    %v454 = vpop.xlane.xlu0 %453
    %v455 = vsel %vm412, %v298, 0.0
    %456 = vadd.xlane.f32.xlu0 %v455
    %v457 = vpop.xlane.xlu0 %456
    %v458 = vsel %vm412, %v299, 0.0
    %459 = vadd.xlane.f32.xlu0 %v458
    %v460 = vpop.xlane.xlu0 %459
    %v461 = vsel %vm412, %v300, 0.0
    %462 = vadd.xlane.f32.xlu0 %v461
    %v463 = vpop.xlane.xlu0 %462
    %v464 = vsel %vm412, %v301, 0.0
    %465 = vadd.xlane.f32.xlu0 %v464
    %v466 = vpop.xlane.xlu0 %465
    %v467 = vsel %vm412, %v302, 0.0
    %468 = vadd.xlane.f32.xlu0 %v467
    %v469 = vpop.xlane.xlu0 %468
    %v470 = vsel %vm412, %v303, 0.0
    %471 = vadd.xlane.f32.xlu0 %v470
    %v472 = vpop.xlane.xlu0 %471
    %v473 = vsel %vm412, %v304, 0.0
    %474 = vadd.xlane.f32.xlu0 %v473
    %v475 = vpop.xlane.xlu0 %474
    %v476 = vsel %vm412, %v305, 0.0
    %477 = vadd.xlane.f32.xlu0 %v476
    %v478 = vpop.xlane.xlu0 %477
    %v479 = vsel %vm412, %v306, 0.0
    %480 = vadd.xlane.f32.xlu0 %v479
    %v481 = vpop.xlane.xlu0 %480
    %v482 = vsel %vm412, %v307, 0.0
    %483 = vadd.xlane.f32.xlu0 %v482
    %v484 = vpop.xlane.xlu0 %483
    %v485 = vsel %vm412, %v308, 0.0
    %486 = vadd.xlane.f32.xlu0 %v485
    %v487 = vpop.xlane.xlu0 %486
    %v488 = vsel %vm412, %v309, 0.0
    %489 = vadd.xlane.f32.xlu0 %v488
    %v490 = vpop.xlane.xlu0 %489
    %v491 = vsel %vm412, %v310, 0.0
    %492 = vadd.xlane.f32.xlu0 %v491
    %v493 = vpop.xlane.xlu0 %492
    %v494 = vsel %vm412, %v311, 0.0
    %495 = vadd.xlane.f32.xlu0 %v494
    %v496 = vpop.xlane.xlu0 %495
    %v497 = vsel %vm412, %v312, 0.0
    %498 = vadd.xlane.f32.xlu0 %v497
    %v499 = vpop.xlane.xlu0 %498
    %v500 = vsel %vm412, %v313, 0.0
    %501 = vadd.xlane.f32.xlu0 %v500
    %v502 = vpop.xlane.xlu0 %501
    %v503 = vsel %vm412, %v314, 0.0
    %504 = vadd.xlane.f32.xlu0 %v503
    %v505 = vpop.xlane.xlu0 %504
    %v506 = vsel %vm412, %v315, 0.0
    %507 = vadd.xlane.f32.xlu0 %v506
    %v508 = vpop.xlane.xlu0 %507
    %v509 = vsel %vm412, %v316, 0.0
    %510 = vadd.xlane.f32.xlu0 %v509
    %v511 = vpop.xlane.xlu0 %510
    %v512 = vsel %vm412, %v317, 0.0
    %513 = vadd.xlane.f32.xlu0 %v512
    %v514 = vpop.xlane.xlu0 %513
    %v515 = vsel %vm412, %v318, 0.0
    %516 = vadd.xlane.f32.xlu0 %v515
    %v517 = vpop.xlane.xlu0 %516
    %v518 = vsel %vm412, %v319, 0.0
    %519 = vadd.xlane.f32.xlu0 %v518
    %v520 = vpop.xlane.xlu0 %519
    %v521 = vsel %vm412, %v320, 0.0
    %522 = vadd.xlane.f32.xlu0 %v521
    %v523 = vpop.xlane.xlu0 %522
    %v524 = vsel %vm412, %v321, 0.0
    %525 = vadd.xlane.f32.xlu0 %v524
    %v526 = vpop.xlane.xlu0 %525
    %v527 = vsel %vm412, %v322, 0.0
    %528 = vadd.xlane.f32.xlu0 %v527
    %v529 = vpop.xlane.xlu0 %528
    %v530 = vsel %vm412, %v323, 0.0
    %531 = vadd.xlane.f32.xlu0 %v530
    %v532 = vpop.xlane.xlu0 %531
    %v533 = vsel %vm412, %v324, 0.0
    %534 = vadd.xlane.f32.xlu0 %v533
    %v535 = vpop.xlane.xlu0 %534
    %v536 = vsel %vm412, %v325, 0.0
    %537 = vadd.xlane.f32.xlu0 %v536
    %v538 = vpop.xlane.xlu0 %537
    %v539 = vsel %vm412, %v326, 0.0
    %540 = vadd.xlane.f32.xlu0 %v539
    %v541 = vpop.xlane.xlu0 %540
    %v542 = vsel %vm412, %v327, 0.0
    %543 = vadd.xlane.f32.xlu0 %v542
    %v544 = vpop.xlane.xlu0 %543
    %v545 = vsel %vm412, %v328, 0.0
    %546 = vadd.xlane.f32.xlu0 %v545
    %v547 = vpop.xlane.xlu0 %546
    %v548 = vsel %vm412, %v329, 0.0
    %549 = vadd.xlane.f32.xlu0 %v548
    %v550 = vpop.xlane.xlu0 %549
    %v551 = vsel %vm412, %v330, 0.0
    %552 = vadd.xlane.f32.xlu0 %v551
    %v553 = vpop.xlane.xlu0 %552
    %v554 = vsel %vm412, %v331, 0.0
    %555 = vadd.xlane.f32.xlu0 %v554
    %v556 = vpop.xlane.xlu0 %555
    %v557 = vsel %vm412, %v332, 0.0
    %558 = vadd.xlane.f32.xlu0 %v557
    %v559 = vpop.xlane.xlu0 %558
    %v560 = vsel %vm412, %v333, 0.0
    %561 = vadd.xlane.f32.xlu0 %v560
    %v562 = vpop.xlane.xlu0 %561
    %v563 = vsel %vm412, %v334, 0.0
    %564 = vadd.xlane.f32.xlu0 %v563
    %v565 = vpop.xlane.xlu0 %564
    %v566 = vsel %vm412, %v335, 0.0
    %567 = vadd.xlane.f32.xlu0 %v566
    %v568 = vpop.xlane.xlu0 %567
    %v569 = vsel %vm412, %v336, 0.0
    %570 = vadd.xlane.f32.xlu0 %v569
    %v571 = vpop.xlane.xlu0 %570
    %v572 = vsel %vm412, %v337, 0.0
    %573 = vadd.xlane.f32.xlu0 %v572
    %v574 = vpop.xlane.xlu0 %573
    %v575 = vsel %vm412, %v338, 0.0
    %576 = vadd.xlane.f32.xlu0 %v575
    %v577 = vpop.xlane.xlu0 %576
    %v578 = vsel %vm412, %v339, 0.0
    %579 = vadd.xlane.f32.xlu0 %v578
    %v580 = vpop.xlane.xlu0 %579
    %v581 = vsel %vm412, %v340, 0.0
    %582 = vadd.xlane.f32.xlu0 %v581
    %v583 = vpop.xlane.xlu0 %582
    %v584 = vsel %vm412, %v341, 0.0
    %585 = vadd.xlane.f32.xlu0 %v584
    %v586 = vpop.xlane.xlu0 %585
    %v587 = vsel %vm412, %v342, 0.0
    %588 = vadd.xlane.f32.xlu0 %v587
    %v589 = vpop.xlane.xlu0 %588
    %v590 = vsel %vm412, %v343, 0.0
    %591 = vadd.xlane.f32.xlu0 %v590
    %v592 = vpop.xlane.xlu0 %591
    %v593 = vsel %vm412, %v344, 0.0
    %594 = vadd.xlane.f32.xlu0 %v593
    %v595 = vpop.xlane.xlu0 %594
    %v596 = vsel %vm412, %v345, 0.0
    %597 = vadd.xlane.f32.xlu0 %v596
    %v598 = vpop.xlane.xlu0 %597
    %v599 = vsel %vm412, %v346, 0.0
    %600 = vadd.xlane.f32.xlu0 %v599
    %v601 = vpop.xlane.xlu0 %600
    %v602 = vsel %vm412, %v347, 0.0
    %603 = vadd.xlane.f32.xlu0 %v602
    %v604 = vpop.xlane.xlu0 %603
    %v605 = vsel %vm412, %v348, 0.0
    %606 = vadd.xlane.f32.xlu0 %v605
    %v607 = vpop.xlane.xlu0 %606
    %v608 = vsel %vm412, %v349, 0.0
    %609 = vadd.xlane.f32.xlu0 %v608
    %v610 = vpop.xlane.xlu0 %609
    %v611 = vsel %vm412, %v350, 0.0
    %612 = vadd.xlane.f32.xlu0 %v611
    %v613 = vpop.xlane.xlu0 %612
    %v614 = vsel %vm412, %v351, 0.0
    %615 = vadd.xlane.f32.xlu0 %v614
    %v616 = vpop.xlane.xlu0 %615
    %v617 = vsel %vm412, %v352, 0.0
    %618 = vadd.xlane.f32.xlu0 %v617
    %v619 = vpop.xlane.xlu0 %618
    %v620 = vsel %vm412, %v353, 0.0
    %621 = vadd.xlane.f32.xlu0 %v620
    %v622 = vpop.xlane.xlu0 %621
    %v623 = vsel %vm412, %v354, 0.0
    %624 = vadd.xlane.f32.xlu0 %v623
    %v625 = vpop.xlane.xlu0 %624
    %v626 = vsel %vm412, %v355, 0.0
    %627 = vadd.xlane.f32.xlu0 %v626
    %v628 = vpop.xlane.xlu0 %627
    %v629 = vsel %vm412, %v356, 0.0
    %630 = vadd.xlane.f32.xlu0 %v629
    %v631 = vpop.xlane.xlu0 %630
    %v632 = vsel %vm412, %v357, 0.0
    %633 = vadd.xlane.f32.xlu0 %v632
    %v634 = vpop.xlane.xlu0 %633
    %v635 = vsel %vm412, %v358, 0.0
    %636 = vadd.xlane.f32.xlu0 %v635
    %v637 = vpop.xlane.xlu0 %636
    %v638 = vsel %vm412, %v359, 0.0
    %639 = vadd.xlane.f32.xlu0 %v638
    %v640 = vpop.xlane.xlu0 %639
    %v641 = vsel %vm412, %v360, 0.0
    %642 = vadd.xlane.f32.xlu0 %v641
    %v643 = vpop.xlane.xlu0 %642
    %v644 = vsel %vm412, %v361, 0.0
    %645 = vadd.xlane.f32.xlu0 %v644
    %v646 = vpop.xlane.xlu0 %645
    %v647 = vsel %vm412, %v362, 0.0
    %648 = vadd.xlane.f32.xlu0 %v647
    %v649 = vpop.xlane.xlu0 %648
    %v650 = vsel %vm412, %v363, 0.0
    %651 = vadd.xlane.f32.xlu0 %v650
    %v652 = vpop.xlane.xlu0 %651
    %v653 = vsel %vm412, %v364, 0.0
    %654 = vadd.xlane.f32.xlu0 %v653
    %v655 = vpop.xlane.xlu0 %654
    %v656 = vsel %vm412, %v365, 0.0
    %657 = vadd.xlane.f32.xlu0 %v656
    %v658 = vpop.xlane.xlu0 %657
    %v659 = vsel %vm412, %v366, 0.0
    %660 = vadd.xlane.f32.xlu0 %v659
    %v661 = vpop.xlane.xlu0 %660
    %v662 = vsel %vm412, %v367, 0.0
    %663 = vadd.xlane.f32.xlu0 %v662
    %v664 = vpop.xlane.xlu0 %663
    %v665 = vsel %vm412, %v368, 0.0
    %666 = vadd.xlane.f32.xlu0 %v665
    %v667 = vpop.xlane.xlu0 %666
    %v668 = vsel %vm412, %v369, 0.0
    %669 = vadd.xlane.f32.xlu0 %v668
    %v670 = vpop.xlane.xlu0 %669
    %v671 = vsel %vm412, %v370, 0.0
    %672 = vadd.xlane.f32.xlu0 %v671
    %v673 = vpop.xlane.xlu0 %672
    %v674 = vsel %vm412, %v371, 0.0
    %675 = vadd.xlane.f32.xlu0 %v674
    %v676 = vpop.xlane.xlu0 %675
    %v677 = vsel %vm412, %v372, 0.0
    %678 = vadd.xlane.f32.xlu0 %v677
    %v679 = vpop.xlane.xlu0 %678
    %v680 = vsel %vm412, %v373, 0.0
    %681 = vadd.xlane.f32.xlu0 %v680
    %v682 = vpop.xlane.xlu0 %681
    %v683 = vsel %vm412, %v374, 0.0
    %684 = vadd.xlane.f32.xlu0 %v683
    %v685 = vpop.xlane.xlu0 %684
    %v686 = vsel %vm412, %v375, 0.0
    %687 = vadd.xlane.f32.xlu0 %v686
    %v688 = vpop.xlane.xlu0 %687
    %v689 = vsel %vm412, %v376, 0.0
    %690 = vadd.xlane.f32.xlu0 %v689
    %v691 = vpop.xlane.xlu0 %690
    %v692 = vsel %vm412, %v377, 0.0
    %693 = vadd.xlane.f32.xlu0 %v692
    %v694 = vpop.xlane.xlu0 %693
    %v695 = vsel %vm412, %v378, 0.0
    %696 = vadd.xlane.f32.xlu0 %v695
    %v697 = vpop.xlane.xlu0 %696
    %v698 = vsel %vm412, %v379, 0.0
    %699 = vadd.xlane.f32.xlu0 %v698
    %v700 = vpop.xlane.xlu0 %699
    %v701 = vsel %vm412, %v380, 0.0
    %702 = vadd.xlane.f32.xlu0 %v701
    %v703 = vpop.xlane.xlu0 %702
    %v704 = vsel %vm412, %v381, 0.0
    %705 = vadd.xlane.f32.xlu0 %v704
    %v706 = vpop.xlane.xlu0 %705
    %v707 = vsel %vm412, %v382, 0.0
    %708 = vadd.xlane.f32.xlu0 %v707
    %v709 = vpop.xlane.xlu0 %708
    %v710 = vsel %vm412, %v383, 0.0
    %711 = vadd.xlane.f32.xlu0 %v710
    %v712 = vpop.xlane.xlu0 %711
    %v713 = vsel %vm412, %v384, 0.0
    %714 = vadd.xlane.f32.xlu0 %v713
    %v715 = vpop.xlane.xlu0 %714
    %v716 = vsel %vm412, %v385, 0.0
    %717 = vadd.xlane.f32.xlu0 %v716
    %v718 = vpop.xlane.xlu0 %717
    %v719 = vsel %vm412, %v386, 0.0
    %720 = vadd.xlane.f32.xlu0 %v719
    %v721 = vpop.xlane.xlu0 %720
    %v722 = vsel %vm412, %v387, 0.0
    %723 = vadd.xlane.f32.xlu0 %v722
    %v724 = vpop.xlane.xlu0 %723
    %v725 = vsel %vm412, %v388, 0.0
    %726 = vadd.xlane.f32.xlu0 %v725
    %v727 = vpop.xlane.xlu0 %726
    %v728 = vsel %vm412, %v389, 0.0
    %729 = vadd.xlane.f32.xlu0 %v728
    %v730 = vpop.xlane.xlu0 %729
    %v731 = vsel %vm412, %v390, 0.0
    %732 = vadd.xlane.f32.xlu0 %v731
    %v733 = vpop.xlane.xlu0 %732
    %v734 = vsel %vm412, %v391, 0.0
    %735 = vadd.xlane.f32.xlu0 %v734
    %v736 = vpop.xlane.xlu0 %735
    %v737 = vsel %vm412, %v392, 0.0
    %738 = vadd.xlane.f32.xlu0 %v737
    %v739 = vpop.xlane.xlu0 %738
    %v740 = vsel %vm412, %v393, 0.0
    %741 = vadd.xlane.f32.xlu0 %v740
    %v742 = vpop.xlane.xlu0 %741
    %v743 = vsel %vm412, %v394, 0.0
    %744 = vadd.xlane.f32.xlu0 %v743
    %v745 = vpop.xlane.xlu0 %744
    %v746 = vsel %vm412, %v395, 0.0
    %747 = vadd.xlane.f32.xlu0 %v746
    %v748 = vpop.xlane.xlu0 %747
    %v749 = vsel %vm412, %v396, 0.0
    %750 = vadd.xlane.f32.xlu0 %v749
    %v751 = vpop.xlane.xlu0 %750
    %v752 = vsel %vm412, %v397, 0.0
    %753 = vadd.xlane.f32.xlu0 %v752
    %v754 = vpop.xlane.xlu0 %753
    %v755 = vsel %vm412, %v398, 0.0
    %756 = vadd.xlane.f32.xlu0 %v755
    %v757 = vpop.xlane.xlu0 %756
    %v758 = vsel %vm412, %v399, 0.0
    %759 = vadd.xlane.f32.xlu0 %v758
    %v760 = vpop.xlane.xlu0 %759
    %v761 = vsel %vm412, %v400, 0.0
    %762 = vadd.xlane.f32.xlu0 %v761
    %v763 = vpop.xlane.xlu0 %762
    %v764 = vsel %vm412, %v401, 0.0
    %765 = vadd.xlane.f32.xlu0 %v764
    %v766 = vpop.xlane.xlu0 %765
    %v767 = vsel %vm412, %v402, 0.0
    %768 = vadd.xlane.f32.xlu0 %v767
    %v769 = vpop.xlane.xlu0 %768
    %v770 = vsel %vm412, %v403, 0.0
    %771 = vadd.xlane.f32.xlu0 %v770
    %v772 = vpop.xlane.xlu0 %771
    %v773 = vsel %vm412, %v404, 0.0
    %774 = vadd.xlane.f32.xlu0 %v773
    %v775 = vpop.xlane.xlu0 %774
    %v776 = vsel %vm412, %v405, 0.0
    %777 = vadd.xlane.f32.xlu0 %v776
    %v778 = vpop.xlane.xlu0 %777
    %v779 = vsel %vm412, %v406, 0.0
    %780 = vadd.xlane.f32.xlu0 %v779
    %v781 = vpop.xlane.xlu0 %780
    %v782 = vsel %vm412, %v407, 0.0
    %783 = vadd.xlane.f32.xlu0 %v782
    %v784 = vpop.xlane.xlu0 %783
    %v785 = vsel %vm412, %v408, 0.0
    %786 = vadd.xlane.f32.xlu0 %v785
    %v787 = vpop.xlane.xlu0 %786
    %v788 = vsel %vm412, %v409, 0.0
    %789 = vadd.xlane.f32.xlu0 %v788
    %v790 = vpop.xlane.xlu0 %789
    %v791 = vsel %vm412, %v410, 0.0
    %792 = vadd.xlane.f32.xlu0 %v791
    %v793 = vpop.xlane.xlu0 %792
    %v794 = vsel %vm412, %v411, 0.0
    %795 = vadd.xlane.f32.xlu0 %v794
    %v796 = vpop.xlane.xlu0 %795
    %v797 = vmul.f32 %v415, 0.03125
    %v798 = vmul.f32 %v418, 0.03125
    %v799 = vmul.f32 %v421, 0.03125
    %v800 = vmul.f32 %v424, 0.03125
    %v801 = vmul.f32 %v427, 0.03125
    %v802 = vmul.f32 %v430, 0.03125
    %v803 = vmul.f32 %v433, 0.03125
    %v804 = vmul.f32 %v436, 0.03125
    %v805 = vmul.f32 %v439, 0.03125
    %v806 = vmul.f32 %v442, 0.03125
    %v807 = vmul.f32 %v445, 0.03125
    %v808 = vmul.f32 %v448, 0.03125
    %v809 = vmul.f32 %v451, 0.03125
    %v810 = vmul.f32 %v454, 0.03125
    %v811 = vmul.f32 %v457, 0.03125
    %v812 = vmul.f32 %v460, 0.03125
    %v813 = vmul.f32 %v463, 0.03125
    %v814 = vmul.f32 %v466, 0.03125
    %v815 = vmul.f32 %v469, 0.03125
    %v816 = vmul.f32 %v472, 0.03125
    %v817 = vmul.f32 %v475, 0.03125
    %v818 = vmul.f32 %v478, 0.03125
    %v819 = vmul.f32 %v481, 0.03125
    %v820 = vmul.f32 %v484, 0.03125
    %v821 = vmul.f32 %v487, 0.03125
    %v822 = vmul.f32 %v490, 0.03125
    %v823 = vmul.f32 %v493, 0.03125
    %v824 = vmul.f32 %v496, 0.03125
    %v825 = vmul.f32 %v499, 0.03125
    %v826 = vmul.f32 %v502, 0.03125
    %v827 = vmul.f32 %v505, 0.03125
    %v828 = vmul.f32 %v508, 0.03125
    %v829 = vmul.f32 %v511, 0.03125
    %v830 = vmul.f32 %v514, 0.03125
    %v831 = vmul.f32 %v517, 0.03125
    %v832 = vmul.f32 %v520, 0.03125
    %v833 = vmul.f32 %v523, 0.03125
    %v834 = vmul.f32 %v526, 0.03125
    %v835 = vmul.f32 %v529, 0.03125
    %v836 = vmul.f32 %v532, 0.03125
    %v837 = vmul.f32 %v535, 0.03125
    %v838 = vmul.f32 %v538, 0.03125
    %v839 = vmul.f32 %v541, 0.03125
    %v840 = vmul.f32 %v544, 0.03125
    %v841 = vmul.f32 %v547, 0.03125
    %v842 = vmul.f32 %v550, 0.03125
    %v843 = vmul.f32 %v553, 0.03125
    %v844 = vmul.f32 %v556, 0.03125
    %v845 = vmul.f32 %v559, 0.03125
    %v846 = vmul.f32 %v562, 0.03125
    %v847 = vmul.f32 %v565, 0.03125
    %v848 = vmul.f32 %v568, 0.03125
    %v849 = vmul.f32 %v571, 0.03125
    %v850 = vmul.f32 %v574, 0.03125
    %v851 = vmul.f32 %v577, 0.03125
    %v852 = vmul.f32 %v580, 0.03125
    %v853 = vmul.f32 %v583, 0.03125
    %v854 = vmul.f32 %v586, 0.03125
    %v855 = vmul.f32 %v589, 0.03125
    %v856 = vmul.f32 %v592, 0.03125
    %v857 = vmul.f32 %v595, 0.03125
    %v858 = vmul.f32 %v598, 0.03125
    %v859 = vmul.f32 %v601, 0.03125
    %v860 = vmul.f32 %v604, 0.03125
    %v861 = vmul.f32 %v607, 0.03125
    %v862 = vmul.f32 %v610, 0.03125
    %v863 = vmul.f32 %v613, 0.03125
    %v864 = vmul.f32 %v616, 0.03125
    %v865 = vmul.f32 %v619, 0.03125
    %v866 = vmul.f32 %v622, 0.03125
    %v867 = vmul.f32 %v625, 0.03125
    %v868 = vmul.f32 %v628, 0.03125
    %v869 = vmul.f32 %v631, 0.03125
    %v870 = vmul.f32 %v634, 0.03125
    %v871 = vmul.f32 %v637, 0.03125
    %v872 = vmul.f32 %v640, 0.03125
    %v873 = vmul.f32 %v643, 0.03125
    %v874 = vmul.f32 %v646, 0.03125
    %v875 = vmul.f32 %v649, 0.03125
    %v876 = vmul.f32 %v652, 0.03125
    %v877 = vmul.f32 %v655, 0.03125
    %v878 = vmul.f32 %v658, 0.03125
    %v879 = vmul.f32 %v661, 0.03125
    %v880 = vmul.f32 %v664, 0.03125
    %v881 = vmul.f32 %v667, 0.03125
    %v882 = vmul.f32 %v670, 0.03125
    %v883 = vmul.f32 %v673, 0.03125
    %v884 = vmul.f32 %v676, 0.03125
    %v885 = vmul.f32 %v679, 0.03125
    %v886 = vmul.f32 %v682, 0.03125
    %v887 = vmul.f32 %v685, 0.03125
    %v888 = vmul.f32 %v688, 0.03125
    %v889 = vmul.f32 %v691, 0.03125
    %v890 = vmul.f32 %v694, 0.03125
    %v891 = vmul.f32 %v697, 0.03125
    %v892 = vmul.f32 %v700, 0.03125
    %v893 = vmul.f32 %v703, 0.03125
    %v894 = vmul.f32 %v706, 0.03125
    %v895 = vmul.f32 %v709, 0.03125
    %v896 = vmul.f32 %v712, 0.03125
    %v897 = vmul.f32 %v715, 0.03125
    %v898 = vmul.f32 %v718, 0.03125
    %v899 = vmul.f32 %v721, 0.03125
    %v900 = vmul.f32 %v724, 0.03125
    %v901 = vmul.f32 %v727, 0.03125
    %v902 = vmul.f32 %v730, 0.03125
    %v903 = vmul.f32 %v733, 0.03125
    %v904 = vmul.f32 %v736, 0.03125
    %v905 = vmul.f32 %v739, 0.03125
    %v906 = vmul.f32 %v742, 0.03125
    %v907 = vmul.f32 %v745, 0.03125
    %v908 = vmul.f32 %v748, 0.03125
    %v909 = vmul.f32 %v751, 0.03125
    %v910 = vmul.f32 %v754, 0.03125
    %v911 = vmul.f32 %v757, 0.03125
    %v912 = vmul.f32 %v760, 0.03125
    %v913 = vmul.f32 %v763, 0.03125
    %v914 = vmul.f32 %v766, 0.03125
    %v915 = vmul.f32 %v769, 0.03125
    %v916 = vmul.f32 %v772, 0.03125
    %v917 = vmul.f32 %v775, 0.03125
    %v918 = vmul.f32 %v778, 0.03125
    %v919 = vmul.f32 %v781, 0.03125
    %v920 = vmul.f32 %v784, 0.03125
    %v921 = vmul.f32 %v787, 0.03125
    %v922 = vmul.f32 %v790, 0.03125
    %v923 = vmul.f32 %v793, 0.03125
    %v924 = vmul.f32 %v796, 0.03125
    %v925 = vadd.f32 %v797, 1e-06
    %v926 = vadd.f32 %v798, 1e-06
    %v927 = vadd.f32 %v799, 1e-06
    %v928 = vadd.f32 %v800, 1e-06
    %v929 = vadd.f32 %v801, 1e-06
    %v930 = vadd.f32 %v802, 1e-06
    %v931 = vadd.f32 %v803, 1e-06
    %v932 = vadd.f32 %v804, 1e-06
    %v933 = vadd.f32 %v805, 1e-06
    %v934 = vadd.f32 %v806, 1e-06
    %v935 = vadd.f32 %v807, 1e-06
    %v936 = vadd.f32 %v808, 1e-06
    %v937 = vadd.f32 %v809, 1e-06
    %v938 = vadd.f32 %v810, 1e-06
    %v939 = vadd.f32 %v811, 1e-06
    %v940 = vadd.f32 %v812, 1e-06
    %v941 = vadd.f32 %v813, 1e-06
    %v942 = vadd.f32 %v814, 1e-06
    %v943 = vadd.f32 %v815, 1e-06
    %v944 = vadd.f32 %v816, 1e-06
    %v945 = vadd.f32 %v817, 1e-06
    %v946 = vadd.f32 %v818, 1e-06
    %v947 = vadd.f32 %v819, 1e-06
    %v948 = vadd.f32 %v820, 1e-06
    %v949 = vadd.f32 %v821, 1e-06
    %v950 = vadd.f32 %v822, 1e-06
    %v951 = vadd.f32 %v823, 1e-06
    %v952 = vadd.f32 %v824, 1e-06
    %v953 = vadd.f32 %v825, 1e-06
    %v954 = vadd.f32 %v826, 1e-06
    %v955 = vadd.f32 %v827, 1e-06
    %v956 = vadd.f32 %v828, 1e-06
    %v957 = vadd.f32 %v829, 1e-06
    %v958 = vadd.f32 %v830, 1e-06
    %v959 = vadd.f32 %v831, 1e-06
    %v960 = vadd.f32 %v832, 1e-06
    %v961 = vadd.f32 %v833, 1e-06
    %v962 = vadd.f32 %v834, 1e-06
    %v963 = vadd.f32 %v835, 1e-06
    %v964 = vadd.f32 %v836, 1e-06
    %v965 = vadd.f32 %v837, 1e-06
    %v966 = vadd.f32 %v838, 1e-06
    %v967 = vadd.f32 %v839, 1e-06
    %v968 = vadd.f32 %v840, 1e-06
    %v969 = vadd.f32 %v841, 1e-06
    %v970 = vadd.f32 %v842, 1e-06
    %v971 = vadd.f32 %v843, 1e-06
    %v972 = vadd.f32 %v844, 1e-06
    %v973 = vadd.f32 %v845, 1e-06
    %v974 = vadd.f32 %v846, 1e-06
    %v975 = vadd.f32 %v847, 1e-06
    %v976 = vadd.f32 %v848, 1e-06
    %v977 = vadd.f32 %v849, 1e-06
    %v978 = vadd.f32 %v850, 1e-06
    %v979 = vadd.f32 %v851, 1e-06
    %v980 = vadd.f32 %v852, 1e-06
    %v981 = vadd.f32 %v853, 1e-06
    %v982 = vadd.f32 %v854, 1e-06
    %v983 = vadd.f32 %v855, 1e-06
    %v984 = vadd.f32 %v856, 1e-06
    %v985 = vadd.f32 %v857, 1e-06
    %v986 = vadd.f32 %v858, 1e-06
    %v987 = vadd.f32 %v859, 1e-06
    %v988 = vadd.f32 %v860, 1e-06
    %v989 = vadd.f32 %v861, 1e-06
    %v990 = vadd.f32 %v862, 1e-06
    %v991 = vadd.f32 %v863, 1e-06
    %v992 = vadd.f32 %v864, 1e-06
    %v993 = vadd.f32 %v865, 1e-06
    %v994 = vadd.f32 %v866, 1e-06
    %v995 = vadd.f32 %v867, 1e-06
    %v996 = vadd.f32 %v868, 1e-06
    %v997 = vadd.f32 %v869, 1e-06
    %v998 = vadd.f32 %v870, 1e-06
    %v999 = vadd.f32 %v871, 1e-06
    %v1000 = vadd.f32 %v872, 1e-06
    %v1001 = vadd.f32 %v873, 1e-06
    %v1002 = vadd.f32 %v874, 1e-06
    %v1003 = vadd.f32 %v875, 1e-06
    %v1004 = vadd.f32 %v876, 1e-06
    %v1005 = vadd.f32 %v877, 1e-06
    %v1006 = vadd.f32 %v878, 1e-06
    %v1007 = vadd.f32 %v879, 1e-06
    %v1008 = vadd.f32 %v880, 1e-06
    %v1009 = vadd.f32 %v881, 1e-06
    %v1010 = vadd.f32 %v882, 1e-06
    %v1011 = vadd.f32 %v883, 1e-06
    %v1012 = vadd.f32 %v884, 1e-06
    %v1013 = vadd.f32 %v885, 1e-06
    %v1014 = vadd.f32 %v886, 1e-06
    %v1015 = vadd.f32 %v887, 1e-06
    %v1016 = vadd.f32 %v888, 1e-06
    %v1017 = vadd.f32 %v889, 1e-06
    %v1018 = vadd.f32 %v890, 1e-06
    %v1019 = vadd.f32 %v891, 1e-06
    %v1020 = vadd.f32 %v892, 1e-06
    %v1021 = vadd.f32 %v893, 1e-06
    %v1022 = vadd.f32 %v894, 1e-06
    %v1023 = vadd.f32 %v895, 1e-06
    %v1024 = vadd.f32 %v896, 1e-06
    %v1025 = vadd.f32 %v897, 1e-06
    %v1026 = vadd.f32 %v898, 1e-06
    %v1027 = vadd.f32 %v899, 1e-06
    %v1028 = vadd.f32 %v900, 1e-06
    %v1029 = vadd.f32 %v901, 1e-06
    %v1030 = vadd.f32 %v902, 1e-06
    %v1031 = vadd.f32 %v903, 1e-06
    %v1032 = vadd.f32 %v904, 1e-06
    %v1033 = vadd.f32 %v905, 1e-06
    %v1034 = vadd.f32 %v906, 1e-06
    %v1035 = vadd.f32 %v907, 1e-06
    %v1036 = vadd.f32 %v908, 1e-06
    %v1037 = vadd.f32 %v909, 1e-06
    %v1038 = vadd.f32 %v910, 1e-06
    %v1039 = vadd.f32 %v911, 1e-06
    %v1040 = vadd.f32 %v912, 1e-06
    %v1041 = vadd.f32 %v913, 1e-06
    %v1042 = vadd.f32 %v914, 1e-06
    %v1043 = vadd.f32 %v915, 1e-06
    %v1044 = vadd.f32 %v916, 1e-06
    %v1045 = vadd.f32 %v917, 1e-06
    %v1046 = vadd.f32 %v918, 1e-06
    %v1047 = vadd.f32 %v919, 1e-06
    %v1048 = vadd.f32 %v920, 1e-06
    %v1049 = vadd.f32 %v921, 1e-06
    %v1050 = vadd.f32 %v922, 1e-06
    %v1051 = vadd.f32 %v923, 1e-06
    %v1052 = vadd.f32 %v924, 1e-06
    %v1053 = vrsqrt.pop %v925
    %v1054 = vrsqrt.pop %v926
    %v1055 = vrsqrt.pop %v927
    %v1056 = vrsqrt.pop %v928
    %v1057 = vrsqrt.pop %v929
    %v1058 = vrsqrt.pop %v930
    %v1059 = vrsqrt.pop %v931
    %v1060 = vrsqrt.pop %v932
    %v1061 = vrsqrt.pop %v933
    %v1062 = vrsqrt.pop %v934
    %v1063 = vrsqrt.pop %v935
    %v1064 = vrsqrt.pop %v936
    %v1065 = vrsqrt.pop %v937
    %v1066 = vrsqrt.pop %v938
    %v1067 = vrsqrt.pop %v939
    %v1068 = vrsqrt.pop %v940
    %v1069 = vrsqrt.pop %v941
    %v1070 = vrsqrt.pop %v942
    %v1071 = vrsqrt.pop %v943
    %v1072 = vrsqrt.pop %v944
    %v1073 = vrsqrt.pop %v945
    %v1074 = vrsqrt.pop %v946
    %v1075 = vrsqrt.pop %v947
    %v1076 = vrsqrt.pop %v948
    %v1077 = vrsqrt.pop %v949
    %v1078 = vrsqrt.pop %v950
    %v1079 = vrsqrt.pop %v951
    %v1080 = vrsqrt.pop %v952
    %v1081 = vrsqrt.pop %v953
    %v1082 = vrsqrt.pop %v954
    %v1083 = vrsqrt.pop %v955
    %v1084 = vrsqrt.pop %v956
    %v1085 = vrsqrt.pop %v957
    %v1086 = vrsqrt.pop %v958
    %v1087 = vrsqrt.pop %v959
    %v1088 = vrsqrt.pop %v960
    %v1089 = vrsqrt.pop %v961
    %v1090 = vrsqrt.pop %v962
    %v1091 = vrsqrt.pop %v963
    %v1092 = vrsqrt.pop %v964
    %v1093 = vrsqrt.pop %v965
    %v1094 = vrsqrt.pop %v966
    %v1095 = vrsqrt.pop %v967
    %v1096 = vrsqrt.pop %v968
    %v1097 = vrsqrt.pop %v969
    %v1098 = vrsqrt.pop %v970
    %v1099 = vrsqrt.pop %v971
    %v1100 = vrsqrt.pop %v972
    %v1101 = vrsqrt.pop %v973
    %v1102 = vrsqrt.pop %v974
    %v1103 = vrsqrt.pop %v975
    %v1104 = vrsqrt.pop %v976
    %v1105 = vrsqrt.pop %v977
    %v1106 = vrsqrt.pop %v978
    %v1107 = vrsqrt.pop %v979
    %v1108 = vrsqrt.pop %v980
    %v1109 = vrsqrt.pop %v981
    %v1110 = vrsqrt.pop %v982
    %v1111 = vrsqrt.pop %v983
    %v1112 = vrsqrt.pop %v984
    %v1113 = vrsqrt.pop %v985
    %v1114 = vrsqrt.pop %v986
    %v1115 = vrsqrt.pop %v987
    %v1116 = vrsqrt.pop %v988
    %v1117 = vrsqrt.pop %v989
    %v1118 = vrsqrt.pop %v990
    %v1119 = vrsqrt.pop %v991
    %v1120 = vrsqrt.pop %v992
    %v1121 = vrsqrt.pop %v993
    %v1122 = vrsqrt.pop %v994
    %v1123 = vrsqrt.pop %v995
    %v1124 = vrsqrt.pop %v996
    %v1125 = vrsqrt.pop %v997
    %v1126 = vrsqrt.pop %v998
    %v1127 = vrsqrt.pop %v999
    %v1128 = vrsqrt.pop %v1000
    %v1129 = vrsqrt.pop %v1001
    %v1130 = vrsqrt.pop %v1002
    %v1131 = vrsqrt.pop %v1003
    %v1132 = vrsqrt.pop %v1004
    %v1133 = vrsqrt.pop %v1005
    %v1134 = vrsqrt.pop %v1006
    %v1135 = vrsqrt.pop %v1007
    %v1136 = vrsqrt.pop %v1008
    %v1137 = vrsqrt.pop %v1009
    %v1138 = vrsqrt.pop %v1010
    %v1139 = vrsqrt.pop %v1011
    %v1140 = vrsqrt.pop %v1012
    %v1141 = vrsqrt.pop %v1013
    %v1142 = vrsqrt.pop %v1014
    %v1143 = vrsqrt.pop %v1015
    %v1144 = vrsqrt.pop %v1016
    %v1145 = vrsqrt.pop %v1017
    %v1146 = vrsqrt.pop %v1018
    %v1147 = vrsqrt.pop %v1019
    %v1148 = vrsqrt.pop %v1020
    %v1149 = vrsqrt.pop %v1021
    %v1150 = vrsqrt.pop %v1022
    %v1151 = vrsqrt.pop %v1023
    %v1152 = vrsqrt.pop %v1024
    %v1153 = vrsqrt.pop %v1025
    %v1154 = vrsqrt.pop %v1026
    %v1155 = vrsqrt.pop %v1027
    %v1156 = vrsqrt.pop %v1028
    %v1157 = vrsqrt.pop %v1029
    %v1158 = vrsqrt.pop %v1030
    %v1159 = vrsqrt.pop %v1031
    %v1160 = vrsqrt.pop %v1032
    %v1161 = vrsqrt.pop %v1033
    %v1162 = vrsqrt.pop %v1034
    %v1163 = vrsqrt.pop %v1035
    %v1164 = vrsqrt.pop %v1036
    %v1165 = vrsqrt.pop %v1037
    %v1166 = vrsqrt.pop %v1038
    %v1167 = vrsqrt.pop %v1039
    %v1168 = vrsqrt.pop %v1040
    %v1169 = vrsqrt.pop %v1041
    %v1170 = vrsqrt.pop %v1042
    %v1171 = vrsqrt.pop %v1043
    %v1172 = vrsqrt.pop %v1044
    %v1173 = vrsqrt.pop %v1045
    %v1174 = vrsqrt.pop %v1046
    %v1175 = vrsqrt.pop %v1047
    %v1176 = vrsqrt.pop %v1048
    %v1177 = vrsqrt.pop %v1049
    %v1178 = vrsqrt.pop %v1050
    %v1179 = vrsqrt.pop %v1051
    %v1180 = vrsqrt.pop %v1052
    %v1181 = vmul.f32 %v156, %v1053
    %v1182 = vmul.f32 %v157, %v1054
    %v1183 = vmul.f32 %v158, %v1055
    %v1184 = vmul.f32 %v159, %v1056
    %v1185 = vmul.f32 %v160, %v1057
    %v1186 = vmul.f32 %v161, %v1058
    %v1187 = vmul.f32 %v162, %v1059
    %v1188 = vmul.f32 %v163, %v1060
    %v1189 = vmul.f32 %v164, %v1061
    %v1190 = vmul.f32 %v165, %v1062
    %v1191 = vmul.f32 %v166, %v1063
    %v1192 = vmul.f32 %v167, %v1064
    %v1193 = vmul.f32 %v168, %v1065
    %v1194 = vmul.f32 %v169, %v1066
    %v1195 = vmul.f32 %v170, %v1067
    %v1196 = vmul.f32 %v171, %v1068
    %v1197 = vmul.f32 %v172, %v1069
    %v1198 = vmul.f32 %v173, %v1070
    %v1199 = vmul.f32 %v174, %v1071
    %v1200 = vmul.f32 %v175, %v1072
    %v1201 = vmul.f32 %v176, %v1073
    %v1202 = vmul.f32 %v177, %v1074
    %v1203 = vmul.f32 %v178, %v1075
    %v1204 = vmul.f32 %v179, %v1076
    %v1205 = vmul.f32 %v180, %v1077
    %v1206 = vmul.f32 %v181, %v1078
    %v1207 = vmul.f32 %v182, %v1079
    %v1208 = vmul.f32 %v183, %v1080
    %v1209 = vmul.f32 %v184, %v1081
    %v1210 = vmul.f32 %v185, %v1082
    %v1211 = vmul.f32 %v186, %v1083
    %v1212 = vmul.f32 %v187, %v1084
    %v1213 = vmul.f32 %v188, %v1085
    %v1214 = vmul.f32 %v189, %v1086
    %v1215 = vmul.f32 %v190, %v1087
    %v1216 = vmul.f32 %v191, %v1088
    %v1217 = vmul.f32 %v192, %v1089
    %v1218 = vmul.f32 %v193, %v1090
    %v1219 = vmul.f32 %v194, %v1091
    %v1220 = vmul.f32 %v195, %v1092
    %v1221 = vmul.f32 %v196, %v1093
    %v1222 = vmul.f32 %v197, %v1094
    %v1223 = vmul.f32 %v198, %v1095
    %v1224 = vmul.f32 %v199, %v1096
    %v1225 = vmul.f32 %v200, %v1097
    %v1226 = vmul.f32 %v201, %v1098
    %v1227 = vmul.f32 %v202, %v1099
    %v1228 = vmul.f32 %v203, %v1100
    %v1229 = vmul.f32 %v204, %v1101
    %v1230 = vmul.f32 %v205, %v1102
    %v1231 = vmul.f32 %v206, %v1103
    %v1232 = vmul.f32 %v207, %v1104
    %v1233 = vmul.f32 %v208, %v1105
    %v1234 = vmul.f32 %v209, %v1106
    %v1235 = vmul.f32 %v210, %v1107
    %v1236 = vmul.f32 %v211, %v1108
    %v1237 = vmul.f32 %v212, %v1109
    %v1238 = vmul.f32 %v213, %v1110
    %v1239 = vmul.f32 %v214, %v1111
    %v1240 = vmul.f32 %v215, %v1112
    %v1241 = vmul.f32 %v216, %v1113
    %v1242 = vmul.f32 %v217, %v1114
    %v1243 = vmul.f32 %v218, %v1115
    %v1244 = vmul.f32 %v219, %v1116
    %v1245 = vmul.f32 %v220, %v1117
    %v1246 = vmul.f32 %v221, %v1118
    %v1247 = vmul.f32 %v222, %v1119
    %v1248 = vmul.f32 %v223, %v1120
    %v1249 = vmul.f32 %v224, %v1121
    %v1250 = vmul.f32 %v225, %v1122
    %v1251 = vmul.f32 %v226, %v1123
    %v1252 = vmul.f32 %v227, %v1124
    %v1253 = vmul.f32 %v228, %v1125
    %v1254 = vmul.f32 %v229, %v1126
    %v1255 = vmul.f32 %v230, %v1127
    %v1256 = vmul.f32 %v231, %v1128
    %v1257 = vmul.f32 %v232, %v1129
    %v1258 = vmul.f32 %v233, %v1130
    %v1259 = vmul.f32 %v234, %v1131
    %v1260 = vmul.f32 %v235, %v1132
    %v1261 = vmul.f32 %v236, %v1133
    %v1262 = vmul.f32 %v237, %v1134
    %v1263 = vmul.f32 %v238, %v1135
    %v1264 = vmul.f32 %v239, %v1136
    %v1265 = vmul.f32 %v240, %v1137
    %v1266 = vmul.f32 %v241, %v1138
    %v1267 = vmul.f32 %v242, %v1139
    %v1268 = vmul.f32 %v243, %v1140
    %v1269 = vmul.f32 %v244, %v1141
    %v1270 = vmul.f32 %v245, %v1142
    %v1271 = vmul.f32 %v246, %v1143
    %v1272 = vmul.f32 %v247, %v1144
    %v1273 = vmul.f32 %v248, %v1145
    %v1274 = vmul.f32 %v249, %v1146
    %v1275 = vmul.f32 %v250, %v1147
    %v1276 = vmul.f32 %v251, %v1148
    %v1277 = vmul.f32 %v252, %v1149
    %v1278 = vmul.f32 %v253, %v1150
    %v1279 = vmul.f32 %v254, %v1151
    %v1280 = vmul.f32 %v255, %v1152
    %v1281 = vmul.f32 %v256, %v1153
    %v1282 = vmul.f32 %v257, %v1154
    %v1283 = vmul.f32 %v258, %v1155
    %v1284 = vmul.f32 %v259, %v1156
    %v1285 = vmul.f32 %v260, %v1157
    %v1286 = vmul.f32 %v261, %v1158
    %v1287 = vmul.f32 %v262, %v1159
    %v1288 = vmul.f32 %v263, %v1160
    %v1289 = vmul.f32 %v264, %v1161
    %v1290 = vmul.f32 %v265, %v1162
    %v1291 = vmul.f32 %v266, %v1163
    %v1292 = vmul.f32 %v267, %v1164
    %v1293 = vmul.f32 %v268, %v1165
    %v1294 = vmul.f32 %v269, %v1166
    %v1295 = vmul.f32 %v270, %v1167
    %v1296 = vmul.f32 %v271, %v1168
    %v1297 = vmul.f32 %v272, %v1169
    %v1298 = vmul.f32 %v273, %v1170
    %v1299 = vmul.f32 %v274, %v1171
    %v1300 = vmul.f32 %v275, %v1172
    %v1301 = vmul.f32 %v276, %v1173
    %v1302 = vmul.f32 %v277, %v1174
    %v1303 = vmul.f32 %v278, %v1175
    %v1304 = vmul.f32 %v279, %v1176
    %v1305 = vmul.f32 %v280, %v1177
    %v1306 = vmul.f32 %v281, %v1178
    %v1307 = vmul.f32 %v282, %v1179
    %v1308 = vmul.f32 %v283, %v1180
    %v1310 = vlaneseq
    %v1311 = vshrl.u32 %v1310, 7
    %v1312 = vsub.s32 0, %v1311
    %v1313 = vrot.slane %v27, %v1312
    %v1315 = vmul.f32 %v1181, %v1313
    %v1316 = vmul.f32 %v1182, %v1313
    %v1317 = vmul.f32 %v1183, %v1313
    %v1318 = vmul.f32 %v1184, %v1313
    %v1319 = vmul.f32 %v1185, %v1313
    %v1320 = vmul.f32 %v1186, %v1313
    %v1321 = vmul.f32 %v1187, %v1313
    %v1322 = vmul.f32 %v1188, %v1313
    %v1323 = vmul.f32 %v1189, %v1313
    %v1324 = vmul.f32 %v1190, %v1313
    %v1325 = vmul.f32 %v1191, %v1313
    %v1326 = vmul.f32 %v1192, %v1313
    %v1327 = vmul.f32 %v1193, %v1313
    %v1328 = vmul.f32 %v1194, %v1313
    %v1329 = vmul.f32 %v1195, %v1313
    %v1330 = vmul.f32 %v1196, %v1313
    %v1331 = vmul.f32 %v1197, %v1313
    %v1332 = vmul.f32 %v1198, %v1313
    %v1333 = vmul.f32 %v1199, %v1313
    %v1334 = vmul.f32 %v1200, %v1313
    %v1335 = vmul.f32 %v1201, %v1313
    %v1336 = vmul.f32 %v1202, %v1313
    %v1337 = vmul.f32 %v1203, %v1313
    %v1338 = vmul.f32 %v1204, %v1313
    %v1339 = vmul.f32 %v1205, %v1313
    %v1340 = vmul.f32 %v1206, %v1313
    %v1341 = vmul.f32 %v1207, %v1313
    %v1342 = vmul.f32 %v1208, %v1313
    %v1343 = vmul.f32 %v1209, %v1313
    %v1344 = vmul.f32 %v1210, %v1313
    %v1345 = vmul.f32 %v1211, %v1313
    %v1346 = vmul.f32 %v1212, %v1313
    %v1347 = vmul.f32 %v1213, %v1313
    %v1348 = vmul.f32 %v1214, %v1313
    %v1349 = vmul.f32 %v1215, %v1313
    %v1350 = vmul.f32 %v1216, %v1313
    %v1351 = vmul.f32 %v1217, %v1313
    %v1352 = vmul.f32 %v1218, %v1313
    %v1353 = vmul.f32 %v1219, %v1313
    %v1354 = vmul.f32 %v1220, %v1313
    %v1355 = vmul.f32 %v1221, %v1313
    %v1356 = vmul.f32 %v1222, %v1313
    %v1357 = vmul.f32 %v1223, %v1313
    %v1358 = vmul.f32 %v1224, %v1313
    %v1359 = vmul.f32 %v1225, %v1313
    %v1360 = vmul.f32 %v1226, %v1313
    %v1361 = vmul.f32 %v1227, %v1313
    %v1362 = vmul.f32 %v1228, %v1313
    %v1363 = vmul.f32 %v1229, %v1313
    %v1364 = vmul.f32 %v1230, %v1313
    %v1365 = vmul.f32 %v1231, %v1313
    %v1366 = vmul.f32 %v1232, %v1313
    %v1367 = vmul.f32 %v1233, %v1313
    %v1368 = vmul.f32 %v1234, %v1313
    %v1369 = vmul.f32 %v1235, %v1313
    %v1370 = vmul.f32 %v1236, %v1313
    %v1371 = vmul.f32 %v1237, %v1313
    %v1372 = vmul.f32 %v1238, %v1313
    %v1373 = vmul.f32 %v1239, %v1313
    %v1374 = vmul.f32 %v1240, %v1313
    %v1375 = vmul.f32 %v1241, %v1313
    %v1376 = vmul.f32 %v1242, %v1313
    %v1377 = vmul.f32 %v1243, %v1313
    %v1378 = vmul.f32 %v1244, %v1313
    %v1379 = vmul.f32 %v1245, %v1313
    %v1380 = vmul.f32 %v1246, %v1313
    %v1381 = vmul.f32 %v1247, %v1313
    %v1382 = vmul.f32 %v1248, %v1313
    %v1383 = vmul.f32 %v1249, %v1313
    %v1384 = vmul.f32 %v1250, %v1313
    %v1385 = vmul.f32 %v1251, %v1313
    %v1386 = vmul.f32 %v1252, %v1313
    %v1387 = vmul.f32 %v1253, %v1313
    %v1388 = vmul.f32 %v1254, %v1313
    %v1389 = vmul.f32 %v1255, %v1313
    %v1390 = vmul.f32 %v1256, %v1313
    %v1391 = vmul.f32 %v1257, %v1313
    %v1392 = vmul.f32 %v1258, %v1313
    %v1393 = vmul.f32 %v1259, %v1313
    %v1394 = vmul.f32 %v1260, %v1313
    %v1395 = vmul.f32 %v1261, %v1313
    %v1396 = vmul.f32 %v1262, %v1313
    %v1397 = vmul.f32 %v1263, %v1313
    %v1398 = vmul.f32 %v1264, %v1313
    %v1399 = vmul.f32 %v1265, %v1313
    %v1400 = vmul.f32 %v1266, %v1313
    %v1401 = vmul.f32 %v1267, %v1313
    %v1402 = vmul.f32 %v1268, %v1313
    %v1403 = vmul.f32 %v1269, %v1313
    %v1404 = vmul.f32 %v1270, %v1313
    %v1405 = vmul.f32 %v1271, %v1313
    %v1406 = vmul.f32 %v1272, %v1313
    %v1407 = vmul.f32 %v1273, %v1313
    %v1408 = vmul.f32 %v1274, %v1313
    %v1409 = vmul.f32 %v1275, %v1313
    %v1410 = vmul.f32 %v1276, %v1313
    %v1411 = vmul.f32 %v1277, %v1313
    %v1412 = vmul.f32 %v1278, %v1313
    %v1413 = vmul.f32 %v1279, %v1313
    %v1414 = vmul.f32 %v1280, %v1313
    %v1415 = vmul.f32 %v1281, %v1313
    %v1416 = vmul.f32 %v1282, %v1313
    %v1417 = vmul.f32 %v1283, %v1313
    %v1418 = vmul.f32 %v1284, %v1313
    %v1419 = vmul.f32 %v1285, %v1313
    %v1420 = vmul.f32 %v1286, %v1313
    %v1421 = vmul.f32 %v1287, %v1313
    %v1422 = vmul.f32 %v1288, %v1313
    %v1423 = vmul.f32 %v1289, %v1313
    %v1424 = vmul.f32 %v1290, %v1313
    %v1425 = vmul.f32 %v1291, %v1313
    %v1426 = vmul.f32 %v1292, %v1313
    %v1427 = vmul.f32 %v1293, %v1313
    %v1428 = vmul.f32 %v1294, %v1313
    %v1429 = vmul.f32 %v1295, %v1313
    %v1430 = vmul.f32 %v1296, %v1313
    %v1431 = vmul.f32 %v1297, %v1313
    %v1432 = vmul.f32 %v1298, %v1313
    %v1433 = vmul.f32 %v1299, %v1313
    %v1434 = vmul.f32 %v1300, %v1313
    %v1435 = vmul.f32 %v1301, %v1313
    %v1436 = vmul.f32 %v1302, %v1313
    %v1437 = vmul.f32 %v1303, %v1313
    %v1438 = vmul.f32 %v1304, %v1313
    %v1439 = vmul.f32 %v1305, %v1313
    %v1440 = vmul.f32 %v1306, %v1313
    %v1441 = vmul.f32 %v1307, %v1313
    %v1442 = vmul.f32 %v1308, %v1313
    %v1443 = vpack.c.bf16 %v1316, %v1315
    %v1444 = vpack.c.bf16 %v1318, %v1317
    %v1445 = vpack.c.bf16 %v1320, %v1319
    %v1446 = vpack.c.bf16 %v1322, %v1321
    %v1447 = vpack.c.bf16 %v1324, %v1323
    %v1448 = vpack.c.bf16 %v1326, %v1325
    %v1449 = vpack.c.bf16 %v1328, %v1327
    %v1450 = vpack.c.bf16 %v1330, %v1329
    %v1451 = vpack.c.bf16 %v1332, %v1331
    %v1452 = vpack.c.bf16 %v1334, %v1333
    %v1453 = vpack.c.bf16 %v1336, %v1335
    %v1454 = vpack.c.bf16 %v1338, %v1337
    %v1455 = vpack.c.bf16 %v1340, %v1339
    %v1456 = vpack.c.bf16 %v1342, %v1341
    %v1457 = vpack.c.bf16 %v1344, %v1343
    %v1458 = vpack.c.bf16 %v1346, %v1345
    %v1459 = vpack.c.bf16 %v1348, %v1347
    %v1460 = vpack.c.bf16 %v1350, %v1349
    %v1461 = vpack.c.bf16 %v1352, %v1351
    %v1462 = vpack.c.bf16 %v1354, %v1353
    %v1463 = vpack.c.bf16 %v1356, %v1355
    %v1464 = vpack.c.bf16 %v1358, %v1357
    %v1465 = vpack.c.bf16 %v1360, %v1359
    %v1466 = vpack.c.bf16 %v1362, %v1361
    %v1467 = vpack.c.bf16 %v1364, %v1363
    %v1468 = vpack.c.bf16 %v1366, %v1365
    %v1469 = vpack.c.bf16 %v1368, %v1367
    %v1470 = vpack.c.bf16 %v1370, %v1369
    %v1471 = vpack.c.bf16 %v1372, %v1371
    %v1472 = vpack.c.bf16 %v1374, %v1373
    %v1473 = vpack.c.bf16 %v1376, %v1375
    %v1474 = vpack.c.bf16 %v1378, %v1377
    %v1475 = vpack.c.bf16 %v1380, %v1379
    %v1476 = vpack.c.bf16 %v1382, %v1381
    %v1477 = vpack.c.bf16 %v1384, %v1383
    %v1478 = vpack.c.bf16 %v1386, %v1385
    %v1479 = vpack.c.bf16 %v1388, %v1387
    %v1480 = vpack.c.bf16 %v1390, %v1389
    %v1481 = vpack.c.bf16 %v1392, %v1391
    %v1482 = vpack.c.bf16 %v1394, %v1393
    %v1483 = vpack.c.bf16 %v1396, %v1395
    %v1484 = vpack.c.bf16 %v1398, %v1397
    %v1485 = vpack.c.bf16 %v1400, %v1399
    %v1486 = vpack.c.bf16 %v1402, %v1401
    %v1487 = vpack.c.bf16 %v1404, %v1403
    %v1488 = vpack.c.bf16 %v1406, %v1405
    %v1489 = vpack.c.bf16 %v1408, %v1407
    %v1490 = vpack.c.bf16 %v1410, %v1409
    %v1491 = vpack.c.bf16 %v1412, %v1411
    %v1492 = vpack.c.bf16 %v1414, %v1413
    %v1493 = vpack.c.bf16 %v1416, %v1415
    %v1494 = vpack.c.bf16 %v1418, %v1417
    %v1495 = vpack.c.bf16 %v1420, %v1419
    %v1496 = vpack.c.bf16 %v1422, %v1421
    %v1497 = vpack.c.bf16 %v1424, %v1423
    %v1498 = vpack.c.bf16 %v1426, %v1425
    %v1499 = vpack.c.bf16 %v1428, %v1427
    %v1500 = vpack.c.bf16 %v1430, %v1429
    %v1501 = vpack.c.bf16 %v1432, %v1431
    %v1502 = vpack.c.bf16 %v1434, %v1433
    %v1503 = vpack.c.bf16 %v1436, %v1435
    %v1504 = vpack.c.bf16 %v1438, %v1437
    %v1505 = vpack.c.bf16 %v1440, %v1439
    %v1506 = vpack.c.bf16 %v1442, %v1441
    %v1571 = vunpack.c.l.b16 %v1443
    %v1572 = vunpack.c.h.b16 %v1443
    %v1573 = vunpack.c.l.b16 %v1444
    %v1574 = vunpack.c.h.b16 %v1444
    %v1575 = vunpack.c.l.b16 %v1445
    %v1576 = vunpack.c.h.b16 %v1445
    %v1577 = vunpack.c.l.b16 %v1446
    %v1578 = vunpack.c.h.b16 %v1446
    %v1579 = vunpack.c.l.b16 %v1447
    %v1580 = vunpack.c.h.b16 %v1447
    %v1581 = vunpack.c.l.b16 %v1448
    %v1582 = vunpack.c.h.b16 %v1448
    %v1583 = vunpack.c.l.b16 %v1449
    %v1584 = vunpack.c.h.b16 %v1449
    %v1585 = vunpack.c.l.b16 %v1450
    %v1586 = vunpack.c.h.b16 %v1450
    %v1587 = vunpack.c.l.b16 %v1451
    %v1588 = vunpack.c.h.b16 %v1451
    %v1589 = vunpack.c.l.b16 %v1452
    %v1590 = vunpack.c.h.b16 %v1452
    %v1591 = vunpack.c.l.b16 %v1453
    %v1592 = vunpack.c.h.b16 %v1453
    %v1593 = vunpack.c.l.b16 %v1454
    %v1594 = vunpack.c.h.b16 %v1454
    %v1595 = vunpack.c.l.b16 %v1455
    %v1596 = vunpack.c.h.b16 %v1455
    %v1597 = vunpack.c.l.b16 %v1456
    %v1598 = vunpack.c.h.b16 %v1456
    %v1599 = vunpack.c.l.b16 %v1457
    %v1600 = vunpack.c.h.b16 %v1457
    %v1601 = vunpack.c.l.b16 %v1458
    %v1602 = vunpack.c.h.b16 %v1458
    %v1603 = vunpack.c.l.b16 %v1459
    %v1604 = vunpack.c.h.b16 %v1459
    %v1605 = vunpack.c.l.b16 %v1460
    %v1606 = vunpack.c.h.b16 %v1460
    %v1607 = vunpack.c.l.b16 %v1461
    %v1608 = vunpack.c.h.b16 %v1461
    %v1609 = vunpack.c.l.b16 %v1462
    %v1610 = vunpack.c.h.b16 %v1462
    %v1611 = vunpack.c.l.b16 %v1463
    %v1612 = vunpack.c.h.b16 %v1463
    %v1613 = vunpack.c.l.b16 %v1464
    %v1614 = vunpack.c.h.b16 %v1464
    %v1615 = vunpack.c.l.b16 %v1465
    %v1616 = vunpack.c.h.b16 %v1465
    %v1617 = vunpack.c.l.b16 %v1466
    %v1618 = vunpack.c.h.b16 %v1466
    %v1619 = vunpack.c.l.b16 %v1467
    %v1620 = vunpack.c.h.b16 %v1467
    %v1621 = vunpack.c.l.b16 %v1468
    %v1622 = vunpack.c.h.b16 %v1468
    %v1623 = vunpack.c.l.b16 %v1469
    %v1624 = vunpack.c.h.b16 %v1469
    %v1625 = vunpack.c.l.b16 %v1470
    %v1626 = vunpack.c.h.b16 %v1470
    %v1627 = vunpack.c.l.b16 %v1471
    %v1628 = vunpack.c.h.b16 %v1471
    %v1629 = vunpack.c.l.b16 %v1472
    %v1630 = vunpack.c.h.b16 %v1472
    %v1631 = vunpack.c.l.b16 %v1473
    %v1632 = vunpack.c.h.b16 %v1473
    %v1633 = vunpack.c.l.b16 %v1474
    %v1634 = vunpack.c.h.b16 %v1474
    %v1635 = vunpack.c.l.b16 %v1475
    %v1636 = vunpack.c.h.b16 %v1475
    %v1637 = vunpack.c.l.b16 %v1476
    %v1638 = vunpack.c.h.b16 %v1476
    %v1639 = vunpack.c.l.b16 %v1477
    %v1640 = vunpack.c.h.b16 %v1477
    %v1641 = vunpack.c.l.b16 %v1478
    %v1642 = vunpack.c.h.b16 %v1478
    %v1643 = vunpack.c.l.b16 %v1479
    %v1644 = vunpack.c.h.b16 %v1479
    %v1645 = vunpack.c.l.b16 %v1480
    %v1646 = vunpack.c.h.b16 %v1480
    %v1647 = vunpack.c.l.b16 %v1481
    %v1648 = vunpack.c.h.b16 %v1481
    %v1649 = vunpack.c.l.b16 %v1482
    %v1650 = vunpack.c.h.b16 %v1482
    %v1651 = vunpack.c.l.b16 %v1483
    %v1652 = vunpack.c.h.b16 %v1483
    %v1653 = vunpack.c.l.b16 %v1484
    %v1654 = vunpack.c.h.b16 %v1484
    %v1655 = vunpack.c.l.b16 %v1485
    %v1656 = vunpack.c.h.b16 %v1485
    %v1657 = vunpack.c.l.b16 %v1486
    %v1658 = vunpack.c.h.b16 %v1486
    %v1659 = vunpack.c.l.b16 %v1487
    %v1660 = vunpack.c.h.b16 %v1487
    %v1661 = vunpack.c.l.b16 %v1488
    %v1662 = vunpack.c.h.b16 %v1488
    %v1663 = vunpack.c.l.b16 %v1489
    %v1664 = vunpack.c.h.b16 %v1489
    %v1665 = vunpack.c.l.b16 %v1490
    %v1666 = vunpack.c.h.b16 %v1490
    %v1667 = vunpack.c.l.b16 %v1491
    %v1668 = vunpack.c.h.b16 %v1491
    %v1669 = vunpack.c.l.b16 %v1492
    %v1670 = vunpack.c.h.b16 %v1492
    %v1671 = vunpack.c.l.b16 %v1493
    %v1672 = vunpack.c.h.b16 %v1493
    %v1673 = vunpack.c.l.b16 %v1494
    %v1674 = vunpack.c.h.b16 %v1494
    %v1675 = vunpack.c.l.b16 %v1495
    %v1676 = vunpack.c.h.b16 %v1495
    %v1677 = vunpack.c.l.b16 %v1496
    %v1678 = vunpack.c.h.b16 %v1496
    %v1679 = vunpack.c.l.b16 %v1497
    %v1680 = vunpack.c.h.b16 %v1497
    %v1681 = vunpack.c.l.b16 %v1498
    %v1682 = vunpack.c.h.b16 %v1498
    %v1683 = vunpack.c.l.b16 %v1499
    %v1684 = vunpack.c.h.b16 %v1499
    %v1685 = vunpack.c.l.b16 %v1500
    %v1686 = vunpack.c.h.b16 %v1500
    %v1687 = vunpack.c.l.b16 %v1501
    %v1688 = vunpack.c.h.b16 %v1501
    %v1689 = vunpack.c.l.b16 %v1502
    %v1690 = vunpack.c.h.b16 %v1502
    %v1691 = vunpack.c.l.b16 %v1503
    %v1692 = vunpack.c.h.b16 %v1503
    %v1693 = vunpack.c.l.b16 %v1504
    %v1694 = vunpack.c.h.b16 %v1504
    %v1695 = vunpack.c.l.b16 %v1505
    %v1696 = vunpack.c.h.b16 %v1505
    %v1697 = vunpack.c.l.b16 %v1506
    %v1698 = vunpack.c.h.b16 %v1506
    %v1699 = vpack.c.b16 %v1571, %v1571
    %v1700 = vpack.c.b16 %v1572, %v1572
    %v1701 = vpack.c.b16 %v1573, %v1573
    %v1702 = vpack.c.b16 %v1574, %v1574
    %v1703 = vpack.c.b16 %v1575, %v1575
    %v1704 = vpack.c.b16 %v1576, %v1576
    %v1705 = vpack.c.b16 %v1577, %v1577
    %v1706 = vpack.c.b16 %v1578, %v1578
    %v1707 = vpack.c.b16 %v1579, %v1579
    %v1708 = vpack.c.b16 %v1580, %v1580
    %v1709 = vpack.c.b16 %v1581, %v1581
    %v1710 = vpack.c.b16 %v1582, %v1582
    %v1711 = vpack.c.b16 %v1583, %v1583
    %v1712 = vpack.c.b16 %v1584, %v1584
    %v1713 = vpack.c.b16 %v1585, %v1585
    %v1714 = vpack.c.b16 %v1586, %v1586
    %v1715 = vpack.c.b16 %v1587, %v1587
    %v1716 = vpack.c.b16 %v1588, %v1588
    %v1717 = vpack.c.b16 %v1589, %v1589
    %v1718 = vpack.c.b16 %v1590, %v1590
    %v1719 = vpack.c.b16 %v1591, %v1591
    %v1720 = vpack.c.b16 %v1592, %v1592
    %v1721 = vpack.c.b16 %v1593, %v1593
    %v1722 = vpack.c.b16 %v1594, %v1594
    %v1723 = vpack.c.b16 %v1595, %v1595
    %v1724 = vpack.c.b16 %v1596, %v1596
    %v1725 = vpack.c.b16 %v1597, %v1597
    %v1726 = vpack.c.b16 %v1598, %v1598
    %v1727 = vpack.c.b16 %v1599, %v1599
    %v1728 = vpack.c.b16 %v1600, %v1600
    %v1729 = vpack.c.b16 %v1601, %v1601
    %v1730 = vpack.c.b16 %v1602, %v1602
    %v1731 = vpack.c.b16 %v1603, %v1603
    %v1732 = vpack.c.b16 %v1604, %v1604
    %v1733 = vpack.c.b16 %v1605, %v1605
    %v1734 = vpack.c.b16 %v1606, %v1606
    %v1735 = vpack.c.b16 %v1607, %v1607
    %v1736 = vpack.c.b16 %v1608, %v1608
    %v1737 = vpack.c.b16 %v1609, %v1609
    %v1738 = vpack.c.b16 %v1610, %v1610
    %v1739 = vpack.c.b16 %v1611, %v1611
    %v1740 = vpack.c.b16 %v1612, %v1612
    %v1741 = vpack.c.b16 %v1613, %v1613
    %v1742 = vpack.c.b16 %v1614, %v1614
    %v1743 = vpack.c.b16 %v1615, %v1615
    %v1744 = vpack.c.b16 %v1616, %v1616
    %v1745 = vpack.c.b16 %v1617, %v1617
    %v1746 = vpack.c.b16 %v1618, %v1618
    %v1747 = vpack.c.b16 %v1619, %v1619
    %v1748 = vpack.c.b16 %v1620, %v1620
    %v1749 = vpack.c.b16 %v1621, %v1621
    %v1750 = vpack.c.b16 %v1622, %v1622
    %v1751 = vpack.c.b16 %v1623, %v1623
    %v1752 = vpack.c.b16 %v1624, %v1624
    %v1753 = vpack.c.b16 %v1625, %v1625
    %v1754 = vpack.c.b16 %v1626, %v1626
    %v1755 = vpack.c.b16 %v1627, %v1627
    %v1756 = vpack.c.b16 %v1628, %v1628
    %v1757 = vpack.c.b16 %v1629, %v1629
    %v1758 = vpack.c.b16 %v1630, %v1630
    %v1759 = vpack.c.b16 %v1631, %v1631
    %v1760 = vpack.c.b16 %v1632, %v1632
    %v1761 = vpack.c.b16 %v1633, %v1633
    %v1762 = vpack.c.b16 %v1634, %v1634
    %v1763 = vpack.c.b16 %v1635, %v1635
    %v1764 = vpack.c.b16 %v1636, %v1636
    %v1765 = vpack.c.b16 %v1637, %v1637
    %v1766 = vpack.c.b16 %v1638, %v1638
    %v1767 = vpack.c.b16 %v1639, %v1639
    %v1768 = vpack.c.b16 %v1640, %v1640
    %v1769 = vpack.c.b16 %v1641, %v1641
    %v1770 = vpack.c.b16 %v1642, %v1642
    %v1771 = vpack.c.b16 %v1643, %v1643
    %v1772 = vpack.c.b16 %v1644, %v1644
    %v1773 = vpack.c.b16 %v1645, %v1645
    %v1774 = vpack.c.b16 %v1646, %v1646
    %v1775 = vpack.c.b16 %v1647, %v1647
    %v1776 = vpack.c.b16 %v1648, %v1648
    %v1777 = vpack.c.b16 %v1649, %v1649
    %v1778 = vpack.c.b16 %v1650, %v1650
    %v1779 = vpack.c.b16 %v1651, %v1651
    %v1780 = vpack.c.b16 %v1652, %v1652
    %v1781 = vpack.c.b16 %v1653, %v1653
    %v1782 = vpack.c.b16 %v1654, %v1654
    %v1783 = vpack.c.b16 %v1655, %v1655
    %v1784 = vpack.c.b16 %v1656, %v1656
    %v1785 = vpack.c.b16 %v1657, %v1657
    %v1786 = vpack.c.b16 %v1658, %v1658
    %v1787 = vpack.c.b16 %v1659, %v1659
    %v1788 = vpack.c.b16 %v1660, %v1660
    %v1789 = vpack.c.b16 %v1661, %v1661
    %v1790 = vpack.c.b16 %v1662, %v1662
    %v1791 = vpack.c.b16 %v1663, %v1663
    %v1792 = vpack.c.b16 %v1664, %v1664
    %v1793 = vpack.c.b16 %v1665, %v1665
    %v1794 = vpack.c.b16 %v1666, %v1666
    %v1795 = vpack.c.b16 %v1667, %v1667
    %v1796 = vpack.c.b16 %v1668, %v1668
    %v1797 = vpack.c.b16 %v1669, %v1669
    %v1798 = vpack.c.b16 %v1670, %v1670
    %v1799 = vpack.c.b16 %v1671, %v1671
    %v1800 = vpack.c.b16 %v1672, %v1672
    %v1801 = vpack.c.b16 %v1673, %v1673
    %v1802 = vpack.c.b16 %v1674, %v1674
    %v1803 = vpack.c.b16 %v1675, %v1675
    %v1804 = vpack.c.b16 %v1676, %v1676
    %v1805 = vpack.c.b16 %v1677, %v1677
    %v1806 = vpack.c.b16 %v1678, %v1678
    %v1807 = vpack.c.b16 %v1679, %v1679
    %v1808 = vpack.c.b16 %v1680, %v1680
    %v1809 = vpack.c.b16 %v1681, %v1681
    %v1810 = vpack.c.b16 %v1682, %v1682
    %v1811 = vpack.c.b16 %v1683, %v1683
    %v1812 = vpack.c.b16 %v1684, %v1684
    %v1813 = vpack.c.b16 %v1685, %v1685
    %v1814 = vpack.c.b16 %v1686, %v1686
    %v1815 = vpack.c.b16 %v1687, %v1687
    %v1816 = vpack.c.b16 %v1688, %v1688
    %v1817 = vpack.c.b16 %v1689, %v1689
    %v1818 = vpack.c.b16 %v1690, %v1690
    %v1819 = vpack.c.b16 %v1691, %v1691
    %v1820 = vpack.c.b16 %v1692, %v1692
    %v1821 = vpack.c.b16 %v1693, %v1693
    %v1822 = vpack.c.b16 %v1694, %v1694
    %v1823 = vpack.c.b16 %v1695, %v1695
    %v1824 = vpack.c.b16 %v1696, %v1696
    %v1825 = vpack.c.b16 %v1697, %v1697
    %v1826 = vpack.c.b16 %v1698, %v1698
    %vm1955 = vcmask 257024
    %1956 = vst.msk [vmem:[#allocation5] sm:$0xf] %vm1955, %v1699
    %1957 = vst.msk [vmem:[#allocation5 + $0x4] sm:$0xf] %vm1955, %v1700
    %1958 = vst.msk [vmem:[#allocation5 + $0x8] sm:$0xf] %vm1955, %v1701
    %1959 = vst.msk [vmem:[#allocation5 + $0xc] sm:$0xf] %vm1955, %v1702
    %1960 = vst.msk [vmem:[#allocation5 + $0x10] sm:$0xf] %vm1955, %v1703
    %1961 = vst.msk [vmem:[#allocation5 + $0x14] sm:$0xf] %vm1955, %v1704
    %1962 = vst.msk [vmem:[#allocation5 + $0x18] sm:$0xf] %vm1955, %v1705
    %1963 = vst.msk [vmem:[#allocation5 + $0x1c] sm:$0xf] %vm1955, %v1706
    %1964 = vst.msk [vmem:[#allocation5 + $0x20] sm:$0xf] %vm1955, %v1707
    %1965 = vst.msk [vmem:[#allocation5 + $0x24] sm:$0xf] %vm1955, %v1708
    %1966 = vst.msk [vmem:[#allocation5 + $0x28] sm:$0xf] %vm1955, %v1709
    %1967 = vst.msk [vmem:[#allocation5 + $0x2c] sm:$0xf] %vm1955, %v1710
    %1968 = vst.msk [vmem:[#allocation5 + $0x30] sm:$0xf] %vm1955, %v1711
    %1969 = vst.msk [vmem:[#allocation5 + $0x34] sm:$0xf] %vm1955, %v1712
    %1970 = vst.msk [vmem:[#allocation5 + $0x38] sm:$0xf] %vm1955, %v1713
    %1971 = vst.msk [vmem:[#allocation5 + $0x3c] sm:$0xf] %vm1955, %v1714
    %1972 = vst.msk [vmem:[#allocation5 + $0x40] sm:$0xf] %vm1955, %v1715
    %1973 = vst.msk [vmem:[#allocation5 + $0x44] sm:$0xf] %vm1955, %v1716
    %1974 = vst.msk [vmem:[#allocation5 + $0x48] sm:$0xf] %vm1955, %v1717
    %1975 = vst.msk [vmem:[#allocation5 + $0x4c] sm:$0xf] %vm1955, %v1718
    %1976 = vst.msk [vmem:[#allocation5 + $0x50] sm:$0xf] %vm1955, %v1719
    %1977 = vst.msk [vmem:[#allocation5 + $0x54] sm:$0xf] %vm1955, %v1720
    %1978 = vst.msk [vmem:[#allocation5 + $0x58] sm:$0xf] %vm1955, %v1721
    %1979 = vst.msk [vmem:[#allocation5 + $0x5c] sm:$0xf] %vm1955, %v1722
    %1980 = vst.msk [vmem:[#allocation5 + $0x60] sm:$0xf] %vm1955, %v1723
    %1981 = vst.msk [vmem:[#allocation5 + $0x64] sm:$0xf] %vm1955, %v1724
    %1982 = vst.msk [vmem:[#allocation5 + $0x68] sm:$0xf] %vm1955, %v1725
    %1983 = vst.msk [vmem:[#allocation5 + $0x6c] sm:$0xf] %vm1955, %v1726
    %1984 = vst.msk [vmem:[#allocation5 + $0x70] sm:$0xf] %vm1955, %v1727
    %1985 = vst.msk [vmem:[#allocation5 + $0x74] sm:$0xf] %vm1955, %v1728
    %1986 = vst.msk [vmem:[#allocation5 + $0x78] sm:$0xf] %vm1955, %v1729
    %1987 = vst.msk [vmem:[#allocation5 + $0x7c] sm:$0xf] %vm1955, %v1730
    %1988 = vst.msk [vmem:[#allocation5 + $0x80] sm:$0xf] %vm1955, %v1731
    %1989 = vst.msk [vmem:[#allocation5 + $0x84] sm:$0xf] %vm1955, %v1732
    %1990 = vst.msk [vmem:[#allocation5 + $0x88] sm:$0xf] %vm1955, %v1733
    %1991 = vst.msk [vmem:[#allocation5 + $0x8c] sm:$0xf] %vm1955, %v1734
    %1992 = vst.msk [vmem:[#allocation5 + $0x90] sm:$0xf] %vm1955, %v1735
    %1993 = vst.msk [vmem:[#allocation5 + $0x94] sm:$0xf] %vm1955, %v1736
    %1994 = vst.msk [vmem:[#allocation5 + $0x98] sm:$0xf] %vm1955, %v1737
    %1995 = vst.msk [vmem:[#allocation5 + $0x9c] sm:$0xf] %vm1955, %v1738
    %1996 = vst.msk [vmem:[#allocation5 + $0xa0] sm:$0xf] %vm1955, %v1739
    %1997 = vst.msk [vmem:[#allocation5 + $0xa4] sm:$0xf] %vm1955, %v1740
    %1998 = vst.msk [vmem:[#allocation5 + $0xa8] sm:$0xf] %vm1955, %v1741
    %1999 = vst.msk [vmem:[#allocation5 + $0xac] sm:$0xf] %vm1955, %v1742
    %2000 = vst.msk [vmem:[#allocation5 + $0xb0] sm:$0xf] %vm1955, %v1743
    %2001 = vst.msk [vmem:[#allocation5 + $0xb4] sm:$0xf] %vm1955, %v1744
    %2002 = vst.msk [vmem:[#allocation5 + $0xb8] sm:$0xf] %vm1955, %v1745
    %2003 = vst.msk [vmem:[#allocation5 + $0xbc] sm:$0xf] %vm1955, %v1746
    %2004 = vst.msk [vmem:[#allocation5 + $0xc0] sm:$0xf] %vm1955, %v1747
    %2005 = vst.msk [vmem:[#allocation5 + $0xc4] sm:$0xf] %vm1955, %v1748
    %2006 = vst.msk [vmem:[#allocation5 + $0xc8] sm:$0xf] %vm1955, %v1749
    %2007 = vst.msk [vmem:[#allocation5 + $0xcc] sm:$0xf] %vm1955, %v1750
    %2008 = vst.msk [vmem:[#allocation5 + $0xd0] sm:$0xf] %vm1955, %v1751
    %2009 = vst.msk [vmem:[#allocation5 + $0xd4] sm:$0xf] %vm1955, %v1752
    %2010 = vst.msk [vmem:[#allocation5 + $0xd8] sm:$0xf] %vm1955, %v1753
    %2011 = vst.msk [vmem:[#allocation5 + $0xdc] sm:$0xf] %vm1955, %v1754
    %2012 = vst.msk [vmem:[#allocation5 + $0xe0] sm:$0xf] %vm1955, %v1755
    %2013 = vst.msk [vmem:[#allocation5 + $0xe4] sm:$0xf] %vm1955, %v1756
    %2014 = vst.msk [vmem:[#allocation5 + $0xe8] sm:$0xf] %vm1955, %v1757
    %2015 = vst.msk [vmem:[#allocation5 + $0xec] sm:$0xf] %vm1955, %v1758
    %2016 = vst.msk [vmem:[#allocation5 + $0xf0] sm:$0xf] %vm1955, %v1759
    %2017 = vst.msk [vmem:[#allocation5 + $0xf4] sm:$0xf] %vm1955, %v1760
    %2018 = vst.msk [vmem:[#allocation5 + $0xf8] sm:$0xf] %vm1955, %v1761
    %2019 = vst.msk [vmem:[#allocation5 + $0xfc] sm:$0xf] %vm1955, %v1762
    %2020 = vst.msk [vmem:[#allocation5 + $0x100] sm:$0xf] %vm1955, %v1763
    %2021 = vst.msk [vmem:[#allocation5 + $0x104] sm:$0xf] %vm1955, %v1764
    %2022 = vst.msk [vmem:[#allocation5 + $0x108] sm:$0xf] %vm1955, %v1765
    %2023 = vst.msk [vmem:[#allocation5 + $0x10c] sm:$0xf] %vm1955, %v1766
    %2024 = vst.msk [vmem:[#allocation5 + $0x110] sm:$0xf] %vm1955, %v1767
    %2025 = vst.msk [vmem:[#allocation5 + $0x114] sm:$0xf] %vm1955, %v1768
    %2026 = vst.msk [vmem:[#allocation5 + $0x118] sm:$0xf] %vm1955, %v1769
    %2027 = vst.msk [vmem:[#allocation5 + $0x11c] sm:$0xf] %vm1955, %v1770
    %2028 = vst.msk [vmem:[#allocation5 + $0x120] sm:$0xf] %vm1955, %v1771
    %2029 = vst.msk [vmem:[#allocation5 + $0x124] sm:$0xf] %vm1955, %v1772
    %2030 = vst.msk [vmem:[#allocation5 + $0x128] sm:$0xf] %vm1955, %v1773
    %2031 = vst.msk [vmem:[#allocation5 + $0x12c] sm:$0xf] %vm1955, %v1774
    %2032 = vst.msk [vmem:[#allocation5 + $0x130] sm:$0xf] %vm1955, %v1775
    %2033 = vst.msk [vmem:[#allocation5 + $0x134] sm:$0xf] %vm1955, %v1776
    %2034 = vst.msk [vmem:[#allocation5 + $0x138] sm:$0xf] %vm1955, %v1777
    %2035 = vst.msk [vmem:[#allocation5 + $0x13c] sm:$0xf] %vm1955, %v1778
    %2036 = vst.msk [vmem:[#allocation5 + $0x140] sm:$0xf] %vm1955, %v1779
    %2037 = vst.msk [vmem:[#allocation5 + $0x144] sm:$0xf] %vm1955, %v1780
    %2038 = vst.msk [vmem:[#allocation5 + $0x148] sm:$0xf] %vm1955, %v1781
    %2039 = vst.msk [vmem:[#allocation5 + $0x14c] sm:$0xf] %vm1955, %v1782
    %2040 = vst.msk [vmem:[#allocation5 + $0x150] sm:$0xf] %vm1955, %v1783
    %2041 = vst.msk [vmem:[#allocation5 + $0x154] sm:$0xf] %vm1955, %v1784
    %2042 = vst.msk [vmem:[#allocation5 + $0x158] sm:$0xf] %vm1955, %v1785
    %2043 = vst.msk [vmem:[#allocation5 + $0x15c] sm:$0xf] %vm1955, %v1786
    %2044 = vst.msk [vmem:[#allocation5 + $0x160] sm:$0xf] %vm1955, %v1787
    %2045 = vst.msk [vmem:[#allocation5 + $0x164] sm:$0xf] %vm1955, %v1788
    %2046 = vst.msk [vmem:[#allocation5 + $0x168] sm:$0xf] %vm1955, %v1789
    %2047 = vst.msk [vmem:[#allocation5 + $0x16c] sm:$0xf] %vm1955, %v1790
    %2048 = vst.msk [vmem:[#allocation5 + $0x170] sm:$0xf] %vm1955, %v1791
    %2049 = vst.msk [vmem:[#allocation5 + $0x174] sm:$0xf] %vm1955, %v1792
    %2050 = vst.msk [vmem:[#allocation5 + $0x178] sm:$0xf] %vm1955, %v1793
    %2051 = vst.msk [vmem:[#allocation5 + $0x17c] sm:$0xf] %vm1955, %v1794
    %2052 = vst.msk [vmem:[#allocation5 + $0x180] sm:$0xf] %vm1955, %v1795
    %2053 = vst.msk [vmem:[#allocation5 + $0x184] sm:$0xf] %vm1955, %v1796
    %2054 = vst.msk [vmem:[#allocation5 + $0x188] sm:$0xf] %vm1955, %v1797
    %2055 = vst.msk [vmem:[#allocation5 + $0x18c] sm:$0xf] %vm1955, %v1798
    %2056 = vst.msk [vmem:[#allocation5 + $0x190] sm:$0xf] %vm1955, %v1799
    %2057 = vst.msk [vmem:[#allocation5 + $0x194] sm:$0xf] %vm1955, %v1800
    %2058 = vst.msk [vmem:[#allocation5 + $0x198] sm:$0xf] %vm1955, %v1801
    %2059 = vst.msk [vmem:[#allocation5 + $0x19c] sm:$0xf] %vm1955, %v1802
    %2060 = vst.msk [vmem:[#allocation5 + $0x1a0] sm:$0xf] %vm1955, %v1803
    %2061 = vst.msk [vmem:[#allocation5 + $0x1a4] sm:$0xf] %vm1955, %v1804
    %2062 = vst.msk [vmem:[#allocation5 + $0x1a8] sm:$0xf] %vm1955, %v1805
    %2063 = vst.msk [vmem:[#allocation5 + $0x1ac] sm:$0xf] %vm1955, %v1806
    %2064 = vst.msk [vmem:[#allocation5 + $0x1b0] sm:$0xf] %vm1955, %v1807
    %2065 = vst.msk [vmem:[#allocation5 + $0x1b4] sm:$0xf] %vm1955, %v1808
    %2066 = vst.msk [vmem:[#allocation5 + $0x1b8] sm:$0xf] %vm1955, %v1809
    %2067 = vst.msk [vmem:[#allocation5 + $0x1bc] sm:$0xf] %vm1955, %v1810
    %2068 = vst.msk [vmem:[#allocation5 + $0x1c0] sm:$0xf] %vm1955, %v1811
    %2069 = vst.msk [vmem:[#allocation5 + $0x1c4] sm:$0xf] %vm1955, %v1812
    %2070 = vst.msk [vmem:[#allocation5 + $0x1c8] sm:$0xf] %vm1955, %v1813
    %2071 = vst.msk [vmem:[#allocation5 + $0x1cc] sm:$0xf] %vm1955, %v1814
    %2072 = vst.msk [vmem:[#allocation5 + $0x1d0] sm:$0xf] %vm1955, %v1815
    %2073 = vst.msk [vmem:[#allocation5 + $0x1d4] sm:$0xf] %vm1955, %v1816
    %2074 = vst.msk [vmem:[#allocation5 + $0x1d8] sm:$0xf] %vm1955, %v1817
    %2075 = vst.msk [vmem:[#allocation5 + $0x1dc] sm:$0xf] %vm1955, %v1818
    %2076 = vst.msk [vmem:[#allocation5 + $0x1e0] sm:$0xf] %vm1955, %v1819
    %2077 = vst.msk [vmem:[#allocation5 + $0x1e4] sm:$0xf] %vm1955, %v1820
    %2078 = vst.msk [vmem:[#allocation5 + $0x1e8] sm:$0xf] %vm1955, %v1821
    %2079 = vst.msk [vmem:[#allocation5 + $0x1ec] sm:$0xf] %vm1955, %v1822
    %2080 = vst.msk [vmem:[#allocation5 + $0x1f0] sm:$0xf] %vm1955, %v1823
    %2081 = vst.msk [vmem:[#allocation5 + $0x1f4] sm:$0xf] %vm1955, %v1824
    %2082 = vst.msk [vmem:[#allocation5 + $0x1f8] sm:$0xf] %vm1955, %v1825
    %2083 = vst.msk [vmem:[#allocation5 + $0x1fc] sm:$0xf] %vm1955, %v1826
    // Predicated region
    $region14: #{tpu_custom_call.1} parent=1 // pred_check
      _
    $region15: #{tpu_custom_call.1} parent=1 // pred_check_branch
      %2085 = sbr.rel (0) target = $region17
    $region16: #{tpu_custom_call.1} parent=1 // pred_region
      %s2087 = ssub.s32 8192, 128
      %2088 = vsyncadd [#allocation4], %s2087
      %s2089 = sshll.u32 [#allocation5], 4
      %s2090 = int_to_ptr.vmem [resolvable:$true] %s2089
      %2095 = dma.vmem_to_hbm [thread:$0]  %s2090, 128, %s2, [#allocation4], 64, 64, 4
    $region17: #{tpu_custom_call.1} parent=1 // pred_fallthru
      _
    // Predicated region
    $region18: #{tpu_custom_call.1} parent=1 // pred_check
      _
    $region19: #{tpu_custom_call.1} parent=1 // pred_check_branch
      %2097 = sbr.rel (0) target = $region21
    $region20: #{tpu_custom_call.1} parent=1 // pred_region
      %2098 = dma.done [#allocation4], 8192
    $region21: #{tpu_custom_call.1} parent=1 // pred_fallthru
      _
    %2099 = vsyncpa [#allocation3], 1
    %2100 = vsyncpa [#allocation4], 1

</llo_original>
